<compile_context>
chip_gen: v5e
topology: v5e:2x2
jax: 0.10.0
libtpu: 0.0.40
codegen_flags: <defaults>
</compile_context>

<pallas_src>
import jax
import jax.numpy as jnp
from jax.experimental import pallas as pl
from jax.experimental.pallas import tpu as pltpu

LANE = 128  # lane width; output padding target


def _leaky_relu(x, negative_slope=0.01):
    # matches torch.nn.LeakyReLU default
    return jnp.where(x > 0, x, negative_slope * x)


def actor_mlp_kernel(x_ref,
                     w1_ref, b1_ref,
                     w2_ref, b2_ref,
                     w3_ref, b3_ref,
                     w4_ref, b4_ref,
                     w5_ref, b5_ref,
                     o_ref):
    """One batch tile of the fused 5-layer MLP.

    Matmuls run on the MXU in bf16 with f32 accumulation; bias add / leaky_relu
    run f32 on the VPU; tanh uses the EUP. Weights are VMEM-resident across the
    whole grid (their block index never changes).
    """
    h = x_ref[...]  # (TB, in) f32

    for w_ref, b_ref in ((w1_ref, b1_ref), (w2_ref, b2_ref),
                         (w3_ref, b3_ref), (w4_ref, b4_ref)):
        h = jnp.dot(h.astype(w_ref.dtype), w_ref[...],
                    preferred_element_type=jnp.float32) + b_ref[...]
        h = _leaky_relu(h)

    y = jnp.dot(h.astype(w5_ref.dtype), w5_ref[...],
                preferred_element_type=jnp.float32) + b5_ref[...]
    o_ref[...] = jnp.tanh(y).astype(o_ref.dtype)  # lane-dense (TB, 128) store


def actor_forward(x, prepped_params, out_dim, *, tile_b=256):
    """x: (B, input_size) f32. prepped_params: list of (W_bf16, b_f32) with
    W:(in, out), b:(1, out); the last layer is zero-padded to LANE columns.
    Returns (B, out_dim) f32."""
    B, in_dim = x.shape
    out_pad = prepped_params[-1][0].shape[1]

    tb = min(tile_b, B)          # block 2nd-to-last dim: multiple of 8 or full dim
    grid = (pl.cdiv(B, tb),)

    x_spec = pl.BlockSpec((tb, in_dim), lambda i: (i, 0))
    out_spec = pl.BlockSpec((tb, out_pad), lambda i: (i, 0))

    flat_params = []
    param_specs = []
    for w, b in prepped_params:
        flat_params.extend([w, b])
        # Full-array blocks with a constant index_map -> weights stay VMEM-resident
        # across all grid steps (single DMA, no re-fetch per batch tile).
        param_specs.append(pl.BlockSpec(w.shape, lambda i: (0, 0)))
        param_specs.append(pl.BlockSpec(b.shape, lambda i: (0, 0)))

    out_padded = pl.pallas_call(
        actor_mlp_kernel,
        out_shape=jax.ShapeDtypeStruct((B, out_pad), jnp.float32),
        grid=grid,
        in_specs=[x_spec] + param_specs,
        out_specs=out_spec,
        compiler_params=pltpu.CompilerParams(
            dimension_semantics=("parallel",)),  # megacore sharding on v7x
    )(x, *flat_params)

    return out_padded[:, :out_dim]


def init_actor_params(key, input_size, output_size, hidden_size=128):
    """Deterministic synthetic init mirroring torch.nn.Linear defaults.
    W stored as (in, out), b as (1, out), both f32."""
    dims = [(input_size, hidden_size),
            (hidden_size, hidden_size),
            (hidden_size, hidden_size),
            (hidden_size, hidden_size),
            (hidden_size, output_size)]
    params = []
    for (din, dout) in dims:
        key, kw, kb = jax.random.split(key, 3)
        bound = 1.0 / jnp.sqrt(jnp.float32(din))
        w = jax.random.uniform(kw, (din, dout), jnp.float32, -bound, bound)
        b = jax.random.uniform(kb, (1, dout), jnp.float32, -bound, bound)
        params.append((w, b))
    return params


def prepare_params(params, lane=LANE):
    """Cast weights to bf16 (biases stay f32) and zero-pad the last layer's output
    dimension to a multiple of `lane` for lane-dense stores / full MXU columns."""
    prepped = []
    last = len(params) - 1
    for idx, (w, b) in enumerate(params):
        if idx == last:
            pad = (-w.shape[1]) % lane
            if pad:
                w = jnp.pad(w, ((0, 0), (0, pad)))
                b = jnp.pad(b, ((0, 0), (0, pad)))
        prepped.append((w.astype(jnp.bfloat16), b.astype(jnp.float32)))
    return prepped


def actor_reference(x, prepped_params):
    """Pure-JAX reference using the same bf16-weight / f32-accumulate numerics."""
    h = x
    for (w, b) in prepped_params[:-1]:
        h = _leaky_relu(jnp.dot(h.astype(w.dtype), w,
                                preferred_element_type=jnp.float32) + b)
    w, b = prepped_params[-1]
    return jnp.tanh(jnp.dot(h.astype(w.dtype), w,
                            preferred_element_type=jnp.float32) + b)


if __name__ == "__main__":
    batch = 512          # batch many env steps per call to amortize launch/DMA overhead
    input_size = 32
    output_size = 8
    hidden_size = 128
    tile_b = 256         # 2 grid steps; weights loaded once, x/out pipelined

    key = jax.random.PRNGKey(0)
    key, kx = jax.random.split(key)
    x = jax.random.normal(kx, (batch, input_size), jnp.float32)

    params_f32 = init_actor_params(key, input_size, output_size, hidden_size)
    params = prepare_params(params_f32)

    out = actor_forward(x, params, output_size, tile_b=tile_b)
    out = jax.block_until_ready(out)

    ref = actor_reference(x, params)[:, :output_size]
    assert out.shape == (batch, output_size)
    assert jnp.allclose(out, ref, atol=1e-3, rtol=1e-3), "mismatch vs reference"

    print("KERNEL_OK")
</pallas_src>

<mosaic_0001>
module attributes {stable_mosaic.version = 11 : i64} {
  func.func @actor_mlp_kernel(%arg0: i32, %arg1: memref<256x32xf32, #tpu.memory_space<vmem>>, %arg2: memref<32x128xbf16, #tpu.memory_space<vmem>>, %arg3: memref<1x128xf32, #tpu.memory_space<vmem>>, %arg4: memref<128x128xbf16, #tpu.memory_space<vmem>>, %arg5: memref<1x128xf32, #tpu.memory_space<vmem>>, %arg6: memref<128x128xbf16, #tpu.memory_space<vmem>>, %arg7: memref<1x128xf32, #tpu.memory_space<vmem>>, %arg8: memref<128x128xbf16, #tpu.memory_space<vmem>>, %arg9: memref<1x128xf32, #tpu.memory_space<vmem>>, %arg10: memref<128x128xbf16, #tpu.memory_space<vmem>>, %arg11: memref<1x128xf32, #tpu.memory_space<vmem>>, %arg12: memref<256x128xf32, #tpu.memory_space<vmem>>) attributes {dimension_semantics = [#tpu.dimension_semantics<parallel>], iteration_bounds = array<i64: 2>, scalar_prefetch = 0 : i64, scratch_operands = 0 : i64, tpu.core_type = #tpu.core_type<tc>, window_params = [{transform_indices = @transform_0, window_bounds = array<i64: 256, 32>}, {pipeline_mode = #tpu.pipeline_mode<synchronous>, transform_indices = @transform_1, window_bounds = array<i64: 32, 128>}, {pipeline_mode = #tpu.pipeline_mode<synchronous>, transform_indices = @transform_2, window_bounds = array<i64: 1, 128>}, {pipeline_mode = #tpu.pipeline_mode<synchronous>, transform_indices = @transform_3, window_bounds = array<i64: 128, 128>}, {pipeline_mode = #tpu.pipeline_mode<synchronous>, transform_indices = @transform_4, window_bounds = array<i64: 1, 128>}, {pipeline_mode = #tpu.pipeline_mode<synchronous>, transform_indices = @transform_5, window_bounds = array<i64: 128, 128>}, {pipeline_mode = #tpu.pipeline_mode<synchronous>, transform_indices = @transform_6, window_bounds = array<i64: 1, 128>}, {pipeline_mode = #tpu.pipeline_mode<synchronous>, transform_indices = @transform_7, window_bounds = array<i64: 128, 128>}, {pipeline_mode = #tpu.pipeline_mode<synchronous>, transform_indices = @transform_8, window_bounds = array<i64: 1, 128>}, {pipeline_mode = #tpu.pipeline_mode<synchronous>, transform_indices = @transform_9, window_bounds = array<i64: 128, 128>}, {pipeline_mode = #tpu.pipeline_mode<synchronous>, transform_indices = @transform_10, window_bounds = array<i64: 1, 128>}, {transform_indices = @transform_11, window_bounds = array<i64: 256, 128>}]} {
    %c0 = arith.constant 0 : index
    %c0_0 = arith.constant 0 : index
    %0 = vector.load %arg1[%c0, %c0_0] : memref<256x32xf32, #tpu.memory_space<vmem>>, vector<256x32xf32>
    %1 = arith.truncf %0 : vector<256x32xf32> to vector<256x32xbf16>
    %c0_1 = arith.constant 0 : index
    %c0_2 = arith.constant 0 : index
    %2 = vector.load %arg2[%c0_1, %c0_2] : memref<32x128xbf16, #tpu.memory_space<vmem>>, vector<32x128xbf16>
    %cst = arith.constant dense<0.000000e+00> : vector<256x128xf32>
    %3 = tpu.matmul %1, %2, %cst {dimension_numbers = #tpu.dot_dimension_numbers<[1], [0], [0], [1], [0, 0, 1, 1], [], []>} : vector<256x32xbf16>, vector<32x128xbf16>, vector<256x128xf32> -> vector<256x128xf32>
    %c0_3 = arith.constant 0 : index
    %c0_4 = arith.constant 0 : index
    %4 = vector.load %arg3[%c0_3, %c0_4] : memref<1x128xf32, #tpu.memory_space<vmem>>, vector<1x128xf32>
    %5 = vector.broadcast %4 : vector<1x128xf32> to vector<256x128xf32>
    %6 = arith.addf %3, %5 : vector<256x128xf32>
    %cst_5 = arith.constant 0.000000e+00 : f32
    %7 = vector.broadcast %cst_5 : f32 to vector<256x128xf32>
    %8 = arith.cmpf ogt, %6, %7 : vector<256x128xf32>
    %cst_6 = arith.constant 0.00999999977 : f32
    %9 = vector.broadcast %cst_6 : f32 to vector<256x128xf32>
    %10 = arith.mulf %9, %6 : vector<256x128xf32>
    %11 = arith.select %8, %6, %10 : vector<256x128xi1>, vector<256x128xf32>
    %12 = arith.truncf %11 : vector<256x128xf32> to vector<256x128xbf16>
    %c0_7 = arith.constant 0 : index
    %c0_8 = arith.constant 0 : index
    %13 = vector.load %arg4[%c0_7, %c0_8] : memref<128x128xbf16, #tpu.memory_space<vmem>>, vector<128x128xbf16>
    %cst_9 = arith.constant dense<0.000000e+00> : vector<256x128xf32>
    %14 = tpu.matmul %12, %13, %cst_9 {dimension_numbers = #tpu.dot_dimension_numbers<[1], [0], [0], [1], [0, 0, 1, 1], [], []>} : vector<256x128xbf16>, vector<128x128xbf16>, vector<256x128xf32> -> vector<256x128xf32>
    %c0_10 = arith.constant 0 : index
    %c0_11 = arith.constant 0 : index
    %15 = vector.load %arg5[%c0_10, %c0_11] : memref<1x128xf32, #tpu.memory_space<vmem>>, vector<1x128xf32>
    %16 = vector.broadcast %15 : vector<1x128xf32> to vector<256x128xf32>
    %17 = arith.addf %14, %16 : vector<256x128xf32>
    %cst_12 = arith.constant 0.000000e+00 : f32
    %18 = vector.broadcast %cst_12 : f32 to vector<256x128xf32>
    %19 = arith.cmpf ogt, %17, %18 : vector<256x128xf32>
    %cst_13 = arith.constant 0.00999999977 : f32
    %20 = vector.broadcast %cst_13 : f32 to vector<256x128xf32>
    %21 = arith.mulf %20, %17 : vector<256x128xf32>
    %22 = arith.select %19, %17, %21 : vector<256x128xi1>, vector<256x128xf32>
    %23 = arith.truncf %22 : vector<256x128xf32> to vector<256x128xbf16>
    %c0_14 = arith.constant 0 : index
    %c0_15 = arith.constant 0 : index
    %24 = vector.load %arg6[%c0_14, %c0_15] : memref<128x128xbf16, #tpu.memory_space<vmem>>, vector<128x128xbf16>
    %cst_16 = arith.constant dense<0.000000e+00> : vector<256x128xf32>
    %25 = tpu.matmul %23, %24, %cst_16 {dimension_numbers = #tpu.dot_dimension_numbers<[1], [0], [0], [1], [0, 0, 1, 1], [], []>} : vector<256x128xbf16>, vector<128x128xbf16>, vector<256x128xf32> -> vector<256x128xf32>
    %c0_17 = arith.constant 0 : index
    %c0_18 = arith.constant 0 : index
    %26 = vector.load %arg7[%c0_17, %c0_18] : memref<1x128xf32, #tpu.memory_space<vmem>>, vector<1x128xf32>
    %27 = vector.broadcast %26 : vector<1x128xf32> to vector<256x128xf32>
    %28 = arith.addf %25, %27 : vector<256x128xf32>
    %cst_19 = arith.constant 0.000000e+00 : f32
    %29 = vector.broadcast %cst_19 : f32 to vector<256x128xf32>
    %30 = arith.cmpf ogt, %28, %29 : vector<256x128xf32>
    %cst_20 = arith.constant 0.00999999977 : f32
    %31 = vector.broadcast %cst_20 : f32 to vector<256x128xf32>
    %32 = arith.mulf %31, %28 : vector<256x128xf32>
    %33 = arith.select %30, %28, %32 : vector<256x128xi1>, vector<256x128xf32>
    %34 = arith.truncf %33 : vector<256x128xf32> to vector<256x128xbf16>
    %c0_21 = arith.constant 0 : index
    %c0_22 = arith.constant 0 : index
    %35 = vector.load %arg8[%c0_21, %c0_22] : memref<128x128xbf16, #tpu.memory_space<vmem>>, vector<128x128xbf16>
    %cst_23 = arith.constant dense<0.000000e+00> : vector<256x128xf32>
    %36 = tpu.matmul %34, %35, %cst_23 {dimension_numbers = #tpu.dot_dimension_numbers<[1], [0], [0], [1], [0, 0, 1, 1], [], []>} : vector<256x128xbf16>, vector<128x128xbf16>, vector<256x128xf32> -> vector<256x128xf32>
    %c0_24 = arith.constant 0 : index
    %c0_25 = arith.constant 0 : index
    %37 = vector.load %arg9[%c0_24, %c0_25] : memref<1x128xf32, #tpu.memory_space<vmem>>, vector<1x128xf32>
    %38 = vector.broadcast %37 : vector<1x128xf32> to vector<256x128xf32>
    %39 = arith.addf %36, %38 : vector<256x128xf32>
    %cst_26 = arith.constant 0.000000e+00 : f32
    %40 = vector.broadcast %cst_26 : f32 to vector<256x128xf32>
    %41 = arith.cmpf ogt, %39, %40 : vector<256x128xf32>
    %cst_27 = arith.constant 0.00999999977 : f32
    %42 = vector.broadcast %cst_27 : f32 to vector<256x128xf32>
    %43 = arith.mulf %42, %39 : vector<256x128xf32>
    %44 = arith.select %41, %39, %43 : vector<256x128xi1>, vector<256x128xf32>
    %45 = arith.truncf %44 : vector<256x128xf32> to vector<256x128xbf16>
    %c0_28 = arith.constant 0 : index
    %c0_29 = arith.constant 0 : index
    %46 = vector.load %arg10[%c0_28, %c0_29] : memref<128x128xbf16, #tpu.memory_space<vmem>>, vector<128x128xbf16>
    %cst_30 = arith.constant dense<0.000000e+00> : vector<256x128xf32>
    %47 = tpu.matmul %45, %46, %cst_30 {dimension_numbers = #tpu.dot_dimension_numbers<[1], [0], [0], [1], [0, 0, 1, 1], [], []>} : vector<256x128xbf16>, vector<128x128xbf16>, vector<256x128xf32> -> vector<256x128xf32>
    %c0_31 = arith.constant 0 : index
    %c0_32 = arith.constant 0 : index
    %48 = vector.load %arg11[%c0_31, %c0_32] : memref<1x128xf32, #tpu.memory_space<vmem>>, vector<1x128xf32>
    %49 = vector.broadcast %48 : vector<1x128xf32> to vector<256x128xf32>
    %50 = arith.addf %47, %49 : vector<256x128xf32>
    %51 = math.tanh %50 : vector<256x128xf32>
    %c0_33 = arith.constant 0 : index
    %c0_34 = arith.constant 0 : index
    %52 = vector.load %arg12[%c0_33, %c0_34] : memref<256x128xf32, #tpu.memory_space<vmem>>, vector<256x128xf32>
    tpu.vector_store %arg12[%c0_33, %c0_34], %51 {strides = array<i32>} : memref<256x128xf32, #tpu.memory_space<vmem>>, vector<256x128xf32>,
    return
  }
  func.func @transform_0(%arg0: i32) -> (i32, i32) {
    %c0_i32 = arith.constant 0 : i32
    %c0_i32_0 = arith.constant 0 : i32
    return %arg0, %c0_i32 : i32, i32
  }
  func.func @transform_1(%arg0: i32) -> (i32, i32) {
    %c0_i32 = arith.constant 0 : i32
    %c0_i32_0 = arith.constant 0 : i32
    %c0_i32_1 = arith.constant 0 : i32
    return %c0_i32, %c0_i32_0 : i32, i32
  }
  func.func @transform_2(%arg0: i32) -> (i32, i32) {
    %c0_i32 = arith.constant 0 : i32
    %c0_i32_0 = arith.constant 0 : i32
    %c0_i32_1 = arith.constant 0 : i32
    return %c0_i32, %c0_i32_0 : i32, i32
  }
  func.func @transform_3(%arg0: i32) -> (i32, i32) {
    %c0_i32 = arith.constant 0 : i32
    %c0_i32_0 = arith.constant 0 : i32
    %c0_i32_1 = arith.constant 0 : i32
    return %c0_i32, %c0_i32_0 : i32, i32
  }
  func.func @transform_4(%arg0: i32) -> (i32, i32) {
    %c0_i32 = arith.constant 0 : i32
    %c0_i32_0 = arith.constant 0 : i32
    %c0_i32_1 = arith.constant 0 : i32
    return %c0_i32, %c0_i32_0 : i32, i32
  }
  func.func @transform_5(%arg0: i32) -> (i32, i32) {
    %c0_i32 = arith.constant 0 : i32
    %c0_i32_0 = arith.constant 0 : i32
    %c0_i32_1 = arith.constant 0 : i32
    return %c0_i32, %c0_i32_0 : i32, i32
  }
  func.func @transform_6(%arg0: i32) -> (i32, i32) {
    %c0_i32 = arith.constant 0 : i32
    %c0_i32_0 = arith.constant 0 : i32
    %c0_i32_1 = arith.constant 0 : i32
    return %c0_i32, %c0_i32_0 : i32, i32
  }
  func.func @transform_7(%arg0: i32) -> (i32, i32) {
    %c0_i32 = arith.constant 0 : i32
    %c0_i32_0 = arith.constant 0 : i32
    %c0_i32_1 = arith.constant 0 : i32
    return %c0_i32, %c0_i32_0 : i32, i32
  }
  func.func @transform_8(%arg0: i32) -> (i32, i32) {
    %c0_i32 = arith.constant 0 : i32
    %c0_i32_0 = arith.constant 0 : i32
    %c0_i32_1 = arith.constant 0 : i32
    return %c0_i32, %c0_i32_0 : i32, i32
  }
  func.func @transform_9(%arg0: i32) -> (i32, i32) {
    %c0_i32 = arith.constant 0 : i32
    %c0_i32_0 = arith.constant 0 : i32
    %c0_i32_1 = arith.constant 0 : i32
    return %c0_i32, %c0_i32_0 : i32, i32
  }
  func.func @transform_10(%arg0: i32) -> (i32, i32) {
    %c0_i32 = arith.constant 0 : i32
    %c0_i32_0 = arith.constant 0 : i32
    %c0_i32_1 = arith.constant 0 : i32
    return %c0_i32, %c0_i32_0 : i32, i32
  }
  func.func @transform_11(%arg0: i32) -> (i32, i32) {
    %c0_i32 = arith.constant 0 : i32
    %c0_i32_0 = arith.constant 0 : i32
    return %arg0, %c0_i32 : i32, i32
  }
}

</mosaic_0001>

<llo_original>
// kernel: tpu_custom_call.1
$region0: #{tpu_custom_call.1}
  #allocation0 [shape = 'u32[]', space=smem, size = 0x4, offset = 0x4, fixed_abs, tag = 'smem constant byte address 0x4 - core index']
  #allocation1 [shape = 'u32[72,128]{1,0:T(1,128)}', space=vmem, size = 0x9000, scoped, tag = 'internal scratch']
  %s0 = inlined_call_operand.vmem [shape: f32[512,32], index: 0, kind: input, shape index: {}]
  %s1 = inlined_call_operand.vmem [shape: bf16[32,128], index: 1, kind: input, shape index: {}]
  %s2 = inlined_call_operand.vmem [shape: f32[1,128], index: 2, kind: input, shape index: {}]
  %s3 = inlined_call_operand.vmem [shape: bf16[128,128], index: 3, kind: input, shape index: {}]
  %s4 = inlined_call_operand.vmem [shape: f32[1,128], index: 4, kind: input, shape index: {}]
  %s5 = inlined_call_operand.vmem [shape: bf16[128,128], index: 5, kind: input, shape index: {}]
  %s6 = inlined_call_operand.vmem [shape: f32[1,128], index: 6, kind: input, shape index: {}]
  %s7 = inlined_call_operand.vmem [shape: bf16[128,128], index: 7, kind: input, shape index: {}]
  %s8 = inlined_call_operand.vmem [shape: f32[1,128], index: 8, kind: input, shape index: {}]
  %s9 = inlined_call_operand.vmem [shape: bf16[128,128], index: 9, kind: input, shape index: {}]
  %s10 = inlined_call_operand.vmem [shape: f32[1,128], index: 10, kind: input, shape index: {}]
  %s11 = inlined_call_operand.hbm [shape: f32[512,128], index: 11, kind: output, shape index: {}]
  %s12 = sld [smem:[#allocation0]]
  $region77: #{tpu_custom_call.1} parent=0
    _
  %s14 = ssub.s32 1, %s12
  %s15 = scalar_select 0, %s14, %s12
  $region1: #{tpu_custom_call.1} parent=0
    #allocation2 [shape = 'u8[262144]{0}', space=vmem, size = 0x40000, scoped, tag = 'output window, operand 0']
    #allocation3 [shape = 's32[2]{0}', space=sflag, size = 0x8, scoped, tag = 'scoped memory for tpu_custom_call.1']
    %16 = vsyncpa [#allocation3], 0
    %s17 = scalar_lea.sflag [#allocation3], 1
    %18 = vsyncpa %s17, 0
    loop: start=0, step=1, limit=4
    $region2: #{tpu_custom_call.1} parent=1 // loop_pre_header
      _
    $region3: #{tpu_custom_call.1} parent=1 // loop_header
      %s20 = sphi 0, %s24
      %p21 = scmp.ge.s32.totalorder %s20, 4
      %s30 = sphi 0, %s32
      %s33 = sphi 0, %s30
      %s34 = sphi 0, %s33
      %s50 = sphi 0, %s34
      %s54 = sphi 0, %s54
      %s56 = sphi 0, %s54
      %s57 = sphi 0, %s56
      %s71 = sphi 0, %s57
      %s75 = sphi 0, %s75
      %s77 = sphi 0, %s75
      %s78 = sphi 0, %s77
      %s92 = sphi 0, %s78
      %s96 = sphi 0, %s96
      %s98 = sphi 0, %s96
      %s99 = sphi 0, %s98
      %s113 = sphi 0, %s99
      %s117 = sphi 0, %s117
      %s119 = sphi 0, %s117
      %s120 = sphi 0, %s119
      %s134 = sphi 0, %s120
      %s138 = sphi 0, %s138
      %s140 = sphi 0, %s138
      %s141 = sphi 0, %s140
      %s155 = sphi 0, %s141
      %s159 = sphi 0, %s159
      %s161 = sphi 0, %s159
      %s162 = sphi 0, %s161
      %s176 = sphi 0, %s162
      %s180 = sphi 0, %s180
      %s182 = sphi 0, %s180
      %s183 = sphi 0, %s182
      %s197 = sphi 0, %s183
      %s201 = sphi 0, %s201
      %s203 = sphi 0, %s201
      %s204 = sphi 0, %s203
      %s218 = sphi 0, %s204
      %s222 = sphi 0, %s222
      %s224 = sphi 0, %s222
      %s225 = sphi 0, %s224
      %s239 = sphi 0, %s225
      %s243 = sphi 0, %s243
      %s245 = sphi 0, %s243
      %s246 = sphi 0, %s245
      %s260 = sphi 0, %s246
      %s266 = sphi 0, %s268
      %s269 = sphi 0, %s266
      %s270 = sphi 0, %s269
      %s286 = sphi 0, %s270
    $region4: #{tpu_custom_call.1} parent=1 // loop_header_branch
      %23 = sbr.rel (%p21) target = $region8
    $region5: #{tpu_custom_call.1} parent=1 // loop_body
      %s25 = ssub.s32 %s20, 1
      %s26 = ssub.s32 %s20, 2
      %s27 = sadd.s32 %s20, 1
      %s28 = ssub.s32 %s20, %s27
      %p29 = scmp.eq.s32.totalorder %s28, 0
      %s31 = sadd.s32 %s30, 1
      %s32 = scalar_select %p29, %s30, %s31
      %p35 = pneg %p29
      %p36 = scmp.eq.s32.totalorder %s20, 1
      %p37 = por %p35, %p36
      %p38 = scmp.ne.s32.totalorder %s30, %s33
      %p39 = scmp.eq.s32.totalorder %s20, 0
      %p40 = por %p38, %p39
      %p41 = scmp.ne.s32.totalorder %s30, %s33
      %p42 = scmp.eq.s32.totalorder %s25, 1
      %p43 = por %p41, %p42
      %p44 = scmp.ne.s32.totalorder %s33, %s34
      %p45 = scmp.eq.s32.totalorder %s25, 0
      %p46 = por %p44, %p45
      %p47 = scmp.ne.s32.totalorder %s33, %s34
      %p48 = scmp.eq.s32.totalorder %s26, 1
      %p49 = por %p47, %p48
      %p51 = scmp.ne.s32.totalorder %s34, %s50
      %p52 = scmp.eq.s32.totalorder %s26, 0
      %p53 = por %p51, %p52
      %s55 = sadd.s32 %s54, 1
      %p58 = scmp.eq.s32.totalorder %s20, 1
      %p59 = scmp.ne.s32.totalorder %s54, %s56
      %p60 = scmp.eq.s32.totalorder %s20, 0
      %p61 = por %p59, %p60
      %p62 = scmp.ne.s32.totalorder %s54, %s56
      %p63 = scmp.eq.s32.totalorder %s25, 1
      %p64 = por %p62, %p63
      %p65 = scmp.ne.s32.totalorder %s56, %s57
      %p66 = scmp.eq.s32.totalorder %s25, 0
      %p67 = por %p65, %p66
      %p68 = scmp.ne.s32.totalorder %s56, %s57
      %p69 = scmp.eq.s32.totalorder %s26, 1
      %p70 = por %p68, %p69
      %p72 = scmp.ne.s32.totalorder %s57, %s71
      %p73 = scmp.eq.s32.totalorder %s26, 0
      %p74 = por %p72, %p73
      %s76 = sadd.s32 %s75, 1
      %p79 = scmp.eq.s32.totalorder %s20, 1
      %p80 = scmp.ne.s32.totalorder %s75, %s77
      %p81 = scmp.eq.s32.totalorder %s20, 0
      %p82 = por %p80, %p81
      %p83 = scmp.ne.s32.totalorder %s75, %s77
      %p84 = scmp.eq.s32.totalorder %s25, 1
      %p85 = por %p83, %p84
      %p86 = scmp.ne.s32.totalorder %s77, %s78
      %p87 = scmp.eq.s32.totalorder %s25, 0
      %p88 = por %p86, %p87
      %p89 = scmp.ne.s32.totalorder %s77, %s78
      %p90 = scmp.eq.s32.totalorder %s26, 1
      %p91 = por %p89, %p90
      %p93 = scmp.ne.s32.totalorder %s78, %s92
      %p94 = scmp.eq.s32.totalorder %s26, 0
      %p95 = por %p93, %p94
      %s97 = sadd.s32 %s96, 1
      %p100 = scmp.eq.s32.totalorder %s20, 1
      %p101 = scmp.ne.s32.totalorder %s96, %s98
      %p102 = scmp.eq.s32.totalorder %s20, 0
      %p103 = por %p101, %p102
      %p104 = scmp.ne.s32.totalorder %s96, %s98
      %p105 = scmp.eq.s32.totalorder %s25, 1
      %p106 = por %p104, %p105
      %p107 = scmp.ne.s32.totalorder %s98, %s99
      %p108 = scmp.eq.s32.totalorder %s25, 0
      %p109 = por %p107, %p108
      %p110 = scmp.ne.s32.totalorder %s98, %s99
      %p111 = scmp.eq.s32.totalorder %s26, 1
      %p112 = por %p110, %p111
      %p114 = scmp.ne.s32.totalorder %s99, %s113
      %p115 = scmp.eq.s32.totalorder %s26, 0
      %p116 = por %p114, %p115
      %s118 = sadd.s32 %s117, 1
      %p121 = scmp.eq.s32.totalorder %s20, 1
      %p122 = scmp.ne.s32.totalorder %s117, %s119
      %p123 = scmp.eq.s32.totalorder %s20, 0
      %p124 = por %p122, %p123
      %p125 = scmp.ne.s32.totalorder %s117, %s119
      %p126 = scmp.eq.s32.totalorder %s25, 1
      %p127 = por %p125, %p126
      %p128 = scmp.ne.s32.totalorder %s119, %s120
      %p129 = scmp.eq.s32.totalorder %s25, 0
      %p130 = por %p128, %p129
      %p131 = scmp.ne.s32.totalorder %s119, %s120
      %p132 = scmp.eq.s32.totalorder %s26, 1
      %p133 = por %p131, %p132
      %p135 = scmp.ne.s32.totalorder %s120, %s134
      %p136 = scmp.eq.s32.totalorder %s26, 0
      %p137 = por %p135, %p136
      %s139 = sadd.s32 %s138, 1
      %p142 = scmp.eq.s32.totalorder %s20, 1
      %p143 = scmp.ne.s32.totalorder %s138, %s140
      %p144 = scmp.eq.s32.totalorder %s20, 0
      %p145 = por %p143, %p144
      %p146 = scmp.ne.s32.totalorder %s138, %s140
      %p147 = scmp.eq.s32.totalorder %s25, 1
      %p148 = por %p146, %p147
      %p149 = scmp.ne.s32.totalorder %s140, %s141
      %p150 = scmp.eq.s32.totalorder %s25, 0
      %p151 = por %p149, %p150
      %p152 = scmp.ne.s32.totalorder %s140, %s141
      %p153 = scmp.eq.s32.totalorder %s26, 1
      %p154 = por %p152, %p153
      %p156 = scmp.ne.s32.totalorder %s141, %s155
      %p157 = scmp.eq.s32.totalorder %s26, 0
      %p158 = por %p156, %p157
      %s160 = sadd.s32 %s159, 1
      %p163 = scmp.eq.s32.totalorder %s20, 1
      %p164 = scmp.ne.s32.totalorder %s159, %s161
      %p165 = scmp.eq.s32.totalorder %s20, 0
      %p166 = por %p164, %p165
      %p167 = scmp.ne.s32.totalorder %s159, %s161
      %p168 = scmp.eq.s32.totalorder %s25, 1
      %p169 = por %p167, %p168
      %p170 = scmp.ne.s32.totalorder %s161, %s162
      %p171 = scmp.eq.s32.totalorder %s25, 0
      %p172 = por %p170, %p171
      %p173 = scmp.ne.s32.totalorder %s161, %s162
      %p174 = scmp.eq.s32.totalorder %s26, 1
      %p175 = por %p173, %p174
      %p177 = scmp.ne.s32.totalorder %s162, %s176
      %p178 = scmp.eq.s32.totalorder %s26, 0
      %p179 = por %p177, %p178
      %s181 = sadd.s32 %s180, 1
      %p184 = scmp.eq.s32.totalorder %s20, 1
      %p185 = scmp.ne.s32.totalorder %s180, %s182
      %p186 = scmp.eq.s32.totalorder %s20, 0
      %p187 = por %p185, %p186
      %p188 = scmp.ne.s32.totalorder %s180, %s182
      %p189 = scmp.eq.s32.totalorder %s25, 1
      %p190 = por %p188, %p189
      %p191 = scmp.ne.s32.totalorder %s182, %s183
      %p192 = scmp.eq.s32.totalorder %s25, 0
      %p193 = por %p191, %p192
      %p194 = scmp.ne.s32.totalorder %s182, %s183
      %p195 = scmp.eq.s32.totalorder %s26, 1
      %p196 = por %p194, %p195
      %p198 = scmp.ne.s32.totalorder %s183, %s197
      %p199 = scmp.eq.s32.totalorder %s26, 0
      %p200 = por %p198, %p199
      %s202 = sadd.s32 %s201, 1
      %p205 = scmp.eq.s32.totalorder %s20, 1
      %p206 = scmp.ne.s32.totalorder %s201, %s203
      %p207 = scmp.eq.s32.totalorder %s20, 0
      %p208 = por %p206, %p207
      %p209 = scmp.ne.s32.totalorder %s201, %s203
      %p210 = scmp.eq.s32.totalorder %s25, 1
      %p211 = por %p209, %p210
      %p212 = scmp.ne.s32.totalorder %s203, %s204
      %p213 = scmp.eq.s32.totalorder %s25, 0
      %p214 = por %p212, %p213
      %p215 = scmp.ne.s32.totalorder %s203, %s204
      %p216 = scmp.eq.s32.totalorder %s26, 1
      %p217 = por %p215, %p216
      %p219 = scmp.ne.s32.totalorder %s204, %s218
      %p220 = scmp.eq.s32.totalorder %s26, 0
      %p221 = por %p219, %p220
      %s223 = sadd.s32 %s222, 1
      %p226 = scmp.eq.s32.totalorder %s20, 1
      %p227 = scmp.ne.s32.totalorder %s222, %s224
      %p228 = scmp.eq.s32.totalorder %s20, 0
      %p229 = por %p227, %p228
      %p230 = scmp.ne.s32.totalorder %s222, %s224
      %p231 = scmp.eq.s32.totalorder %s25, 1
      %p232 = por %p230, %p231
      %p233 = scmp.ne.s32.totalorder %s224, %s225
      %p234 = scmp.eq.s32.totalorder %s25, 0
      %p235 = por %p233, %p234
      %p236 = scmp.ne.s32.totalorder %s224, %s225
      %p237 = scmp.eq.s32.totalorder %s26, 1
      %p238 = por %p236, %p237
      %p240 = scmp.ne.s32.totalorder %s225, %s239
      %p241 = scmp.eq.s32.totalorder %s26, 0
      %p242 = por %p240, %p241
      %s244 = sadd.s32 %s243, 1
      %p247 = scmp.eq.s32.totalorder %s20, 1
      %p248 = scmp.ne.s32.totalorder %s243, %s245
      %p249 = scmp.eq.s32.totalorder %s20, 0
      %p250 = por %p248, %p249
      %p251 = scmp.ne.s32.totalorder %s243, %s245
      %p252 = scmp.eq.s32.totalorder %s25, 1
      %p253 = por %p251, %p252
      %p254 = scmp.ne.s32.totalorder %s245, %s246
      %p255 = scmp.eq.s32.totalorder %s25, 0
      %p256 = por %p254, %p255
      %p257 = scmp.ne.s32.totalorder %s245, %s246
      %p258 = scmp.eq.s32.totalorder %s26, 1
      %p259 = por %p257, %p258
      %p261 = scmp.ne.s32.totalorder %s246, %s260
      %p262 = scmp.eq.s32.totalorder %s26, 0
      %p263 = por %p261, %p262
      %s264 = ssub.s32 %s20, %s27
      %p265 = scmp.eq.s32.totalorder %s264, 0
      %s267 = sadd.s32 %s266, 1
      %s268 = scalar_select %p265, %s266, %s267
      %p271 = pneg %p265
      %p272 = scmp.eq.s32.totalorder %s20, 1
      %p273 = por %p271, %p272
      %p274 = scmp.ne.s32.totalorder %s266, %s269
      %p275 = scmp.eq.s32.totalorder %s20, 0
      %p276 = por %p274, %p275
      %p277 = scmp.ne.s32.totalorder %s266, %s269
      %p278 = scmp.eq.s32.totalorder %s25, 1
      %p279 = por %p277, %p278
      %p280 = scmp.ne.s32.totalorder %s269, %s270
      %p281 = scmp.eq.s32.totalorder %s25, 0
      %p282 = por %p280, %p281
      %p283 = scmp.ne.s32.totalorder %s269, %s270
      %p284 = scmp.eq.s32.totalorder %s26, 1
      %p285 = por %p283, %p284
      %p287 = scmp.ne.s32.totalorder %s270, %s286
      %p288 = scmp.eq.s32.totalorder %s26, 0
      %p289 = por %p287, %p288
      %p290 = scmp.le.s32.totalorder 1, %s20
      %p291 = scmp.lt.s32.totalorder %s20, 3
      %p292 = pnand %p290, %p291
      %p293 = pneg %p292
      // Predicated region
      $region9: #{tpu_custom_call.1} parent=5 // pred_check
        _
      $region10: #{tpu_custom_call.1} parent=5 // pred_check_branch
        %295 = sbr.rel (%p292) target = $region12
      $region11: #{tpu_custom_call.1} parent=5 // pred_region
        %s296 = ssub.s32 %s20, 1
        // Predicated region
        $region13: #{tpu_custom_call.1} parent=11 // pred_check
          %p297 = pneg %p67
        $region14: #{tpu_custom_call.1} parent=11 // pred_check_branch
          %299 = sbr.rel (%p297) target = $region16
        $region15: #{tpu_custom_call.1} parent=11 // pred_region
          _
        $region16: #{tpu_custom_call.1} parent=11 // pred_fallthru
          _
        // Predicated region
        $region17: #{tpu_custom_call.1} parent=11 // pred_check
          %p300 = pneg %p88
        $region18: #{tpu_custom_call.1} parent=11 // pred_check_branch
          %302 = sbr.rel (%p300) target = $region20
        $region19: #{tpu_custom_call.1} parent=11 // pred_region
          _
        $region20: #{tpu_custom_call.1} parent=11 // pred_fallthru
          _
        // Predicated region
        $region21: #{tpu_custom_call.1} parent=11 // pred_check
          %p303 = pneg %p109
        $region22: #{tpu_custom_call.1} parent=11 // pred_check_branch
          %305 = sbr.rel (%p303) target = $region24
        $region23: #{tpu_custom_call.1} parent=11 // pred_region
          _
        $region24: #{tpu_custom_call.1} parent=11 // pred_fallthru
          _
        // Predicated region
        $region25: #{tpu_custom_call.1} parent=11 // pred_check
          %p306 = pneg %p130
        $region26: #{tpu_custom_call.1} parent=11 // pred_check_branch
          %308 = sbr.rel (%p306) target = $region28
        $region27: #{tpu_custom_call.1} parent=11 // pred_region
          _
        $region28: #{tpu_custom_call.1} parent=11 // pred_fallthru
          _
        // Predicated region
        $region29: #{tpu_custom_call.1} parent=11 // pred_check
          %p309 = pneg %p151
        $region30: #{tpu_custom_call.1} parent=11 // pred_check_branch
          %311 = sbr.rel (%p309) target = $region32
        $region31: #{tpu_custom_call.1} parent=11 // pred_region
          _
        $region32: #{tpu_custom_call.1} parent=11 // pred_fallthru
          _
        // Predicated region
        $region33: #{tpu_custom_call.1} parent=11 // pred_check
          %p312 = pneg %p172
        $region34: #{tpu_custom_call.1} parent=11 // pred_check_branch
          %314 = sbr.rel (%p312) target = $region36
        $region35: #{tpu_custom_call.1} parent=11 // pred_region
          _
        $region36: #{tpu_custom_call.1} parent=11 // pred_fallthru
          _
        // Predicated region
        $region37: #{tpu_custom_call.1} parent=11 // pred_check
          %p315 = pneg %p193
        $region38: #{tpu_custom_call.1} parent=11 // pred_check_branch
          %317 = sbr.rel (%p315) target = $region40
        $region39: #{tpu_custom_call.1} parent=11 // pred_region
          _
        $region40: #{tpu_custom_call.1} parent=11 // pred_fallthru
          _
        // Predicated region
        $region41: #{tpu_custom_call.1} parent=11 // pred_check
          %p318 = pneg %p214
        $region42: #{tpu_custom_call.1} parent=11 // pred_check_branch
          %320 = sbr.rel (%p318) target = $region44
        $region43: #{tpu_custom_call.1} parent=11 // pred_region
          _
        $region44: #{tpu_custom_call.1} parent=11 // pred_fallthru
          _
        // Predicated region
        $region45: #{tpu_custom_call.1} parent=11 // pred_check
          %p321 = pneg %p235
        $region46: #{tpu_custom_call.1} parent=11 // pred_check_branch
          %323 = sbr.rel (%p321) target = $region48
        $region47: #{tpu_custom_call.1} parent=11 // pred_region
          _
        $region48: #{tpu_custom_call.1} parent=11 // pred_fallthru
          _
        // Predicated region
        $region49: #{tpu_custom_call.1} parent=11 // pred_check
          %p324 = pneg %p256
        $region50: #{tpu_custom_call.1} parent=11 // pred_check_branch
          %326 = sbr.rel (%p324) target = $region52
        $region51: #{tpu_custom_call.1} parent=11 // pred_region
          _
        $region52: #{tpu_custom_call.1} parent=11 // pred_fallthru
          _
      $region12: #{tpu_custom_call.1} parent=5 // pred_fallthru
        _
      %p327 = scmp.lt.s32.totalorder %s20, 2
      // Predicated region
      $region53: #{tpu_custom_call.1} parent=5 // pred_check
        %p328 = pneg %p327
      $region54: #{tpu_custom_call.1} parent=5 // pred_check_branch
        %330 = sbr.rel (%p328) target = $region56
      $region55: #{tpu_custom_call.1} parent=5 // pred_region
        // Predicated region
        $region57: #{tpu_custom_call.1} parent=55 // pred_check
          %p331 = pneg %p40
        $region58: #{tpu_custom_call.1} parent=55 // pred_check_branch
          %333 = sbr.rel (%p331) target = $region60
        $region59: #{tpu_custom_call.1} parent=55 // pred_region
          %s334 = smul.u32 32, %s20
          %p335 = scmp.lt.s32.totalorder %s334, 63
          %s336 = scalar_select %p335, %s334, 63
          %s337 = smul.addr %s336, 8
          %s338 = scalar_lea.vmem %s0, %s337
          %s339 = smul.u32 32, %s20
        $region60: #{tpu_custom_call.1} parent=55 // pred_fallthru
          _
      $region56: #{tpu_custom_call.1} parent=5 // pred_fallthru
        _
      %p340 = scmp.le.s32.totalorder 1, %s20
      %p341 = scmp.lt.s32.totalorder %s20, 3
      %p342 = pnand %p340, %p341
      %p343 = pneg %p342
      // Predicated region
      $region61: #{tpu_custom_call.1} parent=5 // pred_check
        _
      $region62: #{tpu_custom_call.1} parent=5 // pred_check_branch
        %345 = sbr.rel (%p342) target = $region64
      $region63: #{tpu_custom_call.1} parent=5 // pred_region
        %s346 = ssub.s32 %s20, 1
        %s347 = smul.u32 32, %s25
        %p348 = scmp.lt.s32.totalorder %s347, 63
        %s349 = scalar_select %p348, %s347, 63
        %s350 = smul.addr %s349, 8
        %s351 = scalar_lea.vmem %s0, %s350
        %p352 = pneg %p46
        %p353 = pneg %p43
        %p354 = pneg %p67
        %p355 = pneg %p64
        %p356 = pneg %p88
        %p357 = pneg %p85
        %p358 = pneg %p109
        %p359 = pneg %p106
        %p360 = pneg %p130
        %p361 = pneg %p127
        %p362 = pneg %p151
        %p363 = pneg %p148
        %p364 = pneg %p172
        %p365 = pneg %p169
        %p366 = pneg %p193
        %p367 = pneg %p190
        %p368 = pneg %p214
        %p369 = pneg %p211
        %p370 = pneg %p235
        %p371 = pneg %p232
        %p372 = pneg %p256
        %p373 = pneg %p253
        %p374 = pneg %p282
        %p375 = pneg %p279
        %s376 = sand.u32 %s269, 1
        %s377 = scalar_lea.sflag [#allocation3], %s376
        %s378 = sand.u32 %s269, 1
        %s379 = smul.addr %s378, 256
        %s380 = scalar_lea.vmem [#allocation2], %s379
        %s381 = smul.u32 32, %s25
        %p382 = scmp.lt.s32.totalorder %s381, 63
        %s383 = scalar_select %p382, %s381, 63
        %s384 = smul.addr %s383, 8
        %s385 = scalar_lea.vmem %s0, %s384
        %s386 = smul.u32 32, %s25
        %s387 = smul.u32 32, %s25
        %v389 = vld [vmem:[%s385] sm:$0xff]
        %v390 = vld [vmem:[%s385 + $0x8] sm:$0xff]
        %v391 = vld [vmem:[%s385 + $0x10] sm:$0xff]
        %v392 = vld [vmem:[%s385 + $0x18] sm:$0xff]
        %v393 = vld [vmem:[%s385 + $0x20] sm:$0xff]
        %v394 = vld [vmem:[%s385 + $0x28] sm:$0xff]
        %v395 = vld [vmem:[%s385 + $0x30] sm:$0xff]
        %v396 = vld [vmem:[%s385 + $0x38] sm:$0xff]
        %v397 = vld [vmem:[%s385 + $0x40] sm:$0xff]
        %v398 = vld [vmem:[%s385 + $0x48] sm:$0xff]
        %v399 = vld [vmem:[%s385 + $0x50] sm:$0xff]
        %v400 = vld [vmem:[%s385 + $0x58] sm:$0xff]
        %v401 = vld [vmem:[%s385 + $0x60] sm:$0xff]
        %v402 = vld [vmem:[%s385 + $0x68] sm:$0xff]
        %v403 = vld [vmem:[%s385 + $0x70] sm:$0xff]
        %v404 = vld [vmem:[%s385 + $0x78] sm:$0xff]
        %v405 = vld [vmem:[%s385 + $0x80] sm:$0xff]
        %v406 = vld [vmem:[%s385 + $0x88] sm:$0xff]
        %v407 = vld [vmem:[%s385 + $0x90] sm:$0xff]
        %v408 = vld [vmem:[%s385 + $0x98] sm:$0xff]
        %v409 = vld [vmem:[%s385 + $0xa0] sm:$0xff]
        %v410 = vld [vmem:[%s385 + $0xa8] sm:$0xff]
        %v411 = vld [vmem:[%s385 + $0xb0] sm:$0xff]
        %v412 = vld [vmem:[%s385 + $0xb8] sm:$0xff]
        %v413 = vld [vmem:[%s385 + $0xc0] sm:$0xff]
        %v414 = vld [vmem:[%s385 + $0xc8] sm:$0xff]
        %v415 = vld [vmem:[%s385 + $0xd0] sm:$0xff]
        %v416 = vld [vmem:[%s385 + $0xd8] sm:$0xff]
        %v417 = vld [vmem:[%s385 + $0xe0] sm:$0xff]
        %v418 = vld [vmem:[%s385 + $0xe8] sm:$0xff]
        %v419 = vld [vmem:[%s385 + $0xf0] sm:$0xff]
        %v420 = vld [vmem:[%s385 + $0xf8] sm:$0xff]
        %v421 = vpack.c.bf16 %v390, %v389
        %v422 = vpack.c.bf16 %v392, %v391
        %v423 = vpack.c.bf16 %v394, %v393
        %v424 = vpack.c.bf16 %v396, %v395
        %v425 = vpack.c.bf16 %v398, %v397
        %v426 = vpack.c.bf16 %v400, %v399
        %v427 = vpack.c.bf16 %v402, %v401
        %v428 = vpack.c.bf16 %v404, %v403
        %v429 = vpack.c.bf16 %v406, %v405
        %v430 = vpack.c.bf16 %v408, %v407
        %v431 = vpack.c.bf16 %v410, %v409
        %v432 = vpack.c.bf16 %v412, %v411
        %v433 = vpack.c.bf16 %v414, %v413
        %v434 = vpack.c.bf16 %v416, %v415
        %v435 = vpack.c.bf16 %v418, %v417
        %v436 = vpack.c.bf16 %v420, %v419
        %v437 = vld [vmem:[%s1] sm:$0xf]
        %v438 = vld [vmem:[%s1 + $0x4] sm:$0xf]
        %v439 = vld [vmem:[%s1 + $0x8] sm:$0xf]
        %v440 = vld [vmem:[%s1 + $0xc] sm:$0xf]
        %v441 = vld [vmem:[%s2] sm:$0x1]
        %v443 = vperm.slane %v441, 0
        %v449 = vunpack.c.l.b16 %v437
        %v450 = vunpack.c.l.b16 %v438
        %v451 = vunpack.c.l.b16 %v439
        %v452 = vunpack.c.l.b16 %v440
        %v453 = vpack.c.b16 %v450, %v449
        %v454 = vpack.c.b16 %v452, %v451
        %vm457 = vcmask 261120
        %v459 = vsel %vm457, %v421, 0
        %v462 = vsel %vm457, %v422, 0
        %v465 = vsel %vm457, %v423, 0
        %v468 = vsel %vm457, %v424, 0
        %v471 = vsel %vm457, %v425, 0
        %v474 = vsel %vm457, %v426, 0
        %v477 = vsel %vm457, %v427, 0
        %v480 = vsel %vm457, %v428, 0
        %v483 = vsel %vm457, %v429, 0
        %v486 = vsel %vm457, %v430, 0
        %v489 = vsel %vm457, %v431, 0
        %v492 = vsel %vm457, %v432, 0
        %v495 = vsel %vm457, %v433, 0
        %v498 = vsel %vm457, %v434, 0
        %v501 = vsel %vm457, %v435, 0
        %v504 = vsel %vm457, %v436, 0
        %506 = vmatpush.bf16.msra.mxu0 0
        %507 = vmatpush.bf16.msra.mxu0 0
        %508 = vmatpush.bf16.msra.mxu0 0
        %509 = vmatpush.bf16.msra.mxu0 0
        %510 = vmatpush.bf16.msra.mxu0 0
        %511 = vmatpush.bf16.msra.mxu0 0
        %512 = vmatpush.bf16.msra.mxu0 %v454
        %513 = vmatpush.bf16.msra.mxu0 %v453
        %514 = vmatmul.bf16.gmra.mxu0 %v459
        %v515 = vpop.f32.mrf.mxu0
        %v516 = vadd.f32 %v443, %v515
        %v517 = vpop.f32.mrf.mxu0
        %v518 = vadd.f32 %v443, %v517
        %519 = vmatmul.bf16.gmra.mxu0 %v462
        %v520 = vpop.f32.mrf.mxu0
        %v521 = vadd.f32 %v443, %v520
        %v522 = vpop.f32.mrf.mxu0
        %v523 = vadd.f32 %v443, %v522
        %524 = vmatmul.bf16.gmra.mxu0 %v465
        %v525 = vpop.f32.mrf.mxu0
        %v526 = vadd.f32 %v443, %v525
        %v527 = vpop.f32.mrf.mxu0
        %v528 = vadd.f32 %v443, %v527
        %529 = vmatmul.bf16.gmra.mxu0 %v468
        %v530 = vpop.f32.mrf.mxu0
        %v531 = vadd.f32 %v443, %v530
        %v532 = vpop.f32.mrf.mxu0
        %v533 = vadd.f32 %v443, %v532
        %534 = vmatmul.bf16.gmra.mxu0 %v471
        %v535 = vpop.f32.mrf.mxu0
        %v536 = vadd.f32 %v443, %v535
        %v537 = vpop.f32.mrf.mxu0
        %v538 = vadd.f32 %v443, %v537
        %539 = vmatmul.bf16.gmra.mxu0 %v474
        %v540 = vpop.f32.mrf.mxu0
        %v541 = vadd.f32 %v443, %v540
        %v542 = vpop.f32.mrf.mxu0
        %v543 = vadd.f32 %v443, %v542
        %544 = vmatmul.bf16.gmra.mxu0 %v477
        %v545 = vpop.f32.mrf.mxu0
        %v546 = vadd.f32 %v443, %v545
        %v547 = vpop.f32.mrf.mxu0
        %v548 = vadd.f32 %v443, %v547
        %549 = vmatmul.bf16.gmra.mxu0 %v480
        %v550 = vpop.f32.mrf.mxu0
        %v551 = vadd.f32 %v443, %v550
        %v552 = vpop.f32.mrf.mxu0
        %v553 = vadd.f32 %v443, %v552
        %554 = vmatmul.bf16.gmra.mxu0 %v483
        %v555 = vpop.f32.mrf.mxu0
        %v556 = vadd.f32 %v443, %v555
        %v557 = vpop.f32.mrf.mxu0
        %v558 = vadd.f32 %v443, %v557
        %559 = vmatmul.bf16.gmra.mxu0 %v486
        %v560 = vpop.f32.mrf.mxu0
        %v561 = vadd.f32 %v443, %v560
        %v562 = vpop.f32.mrf.mxu0
        %v563 = vadd.f32 %v443, %v562
        %564 = vmatmul.bf16.gmra.mxu0 %v489
        %v565 = vpop.f32.mrf.mxu0
        %v566 = vadd.f32 %v443, %v565
        %v567 = vpop.f32.mrf.mxu0
        %v568 = vadd.f32 %v443, %v567
        %569 = vmatmul.bf16.gmra.mxu0 %v492
        %v570 = vpop.f32.mrf.mxu0
        %v571 = vadd.f32 %v443, %v570
        %v572 = vpop.f32.mrf.mxu0
        %v573 = vadd.f32 %v443, %v572
        %574 = vmatmul.bf16.gmra.mxu0 %v495
        %v575 = vpop.f32.mrf.mxu0
        %v576 = vadd.f32 %v443, %v575
        %v577 = vpop.f32.mrf.mxu0
        %v578 = vadd.f32 %v443, %v577
        %579 = vmatmul.bf16.gmra.mxu0 %v498
        %v580 = vpop.f32.mrf.mxu0
        %v581 = vadd.f32 %v443, %v580
        %v582 = vpop.f32.mrf.mxu0
        %v583 = vadd.f32 %v443, %v582
        %584 = vmatmul.bf16.gmra.mxu0 %v501
        %v585 = vpop.f32.mrf.mxu0
        %v586 = vadd.f32 %v443, %v585
        %v587 = vpop.f32.mrf.mxu0
        %v588 = vadd.f32 %v443, %v587
        %589 = vmatmul.bf16.gmra.mxu0 %v504
        %v590 = vpop.f32.mrf.mxu0
        %v591 = vadd.f32 %v443, %v590
        %v592 = vpop.f32.mrf.mxu0
        %v593 = vadd.f32 %v443, %v592
        %594 = vdwg.mxu0
        %vm595 = vcmp.gt.f32.partialorder %v516, 0.0
        %vm596 = vcmp.gt.f32.partialorder %v518, 0.0
        %vm597 = vcmp.gt.f32.partialorder %v521, 0.0
        %vm598 = vcmp.gt.f32.partialorder %v523, 0.0
        %vm599 = vcmp.gt.f32.partialorder %v526, 0.0
        %vm600 = vcmp.gt.f32.partialorder %v528, 0.0
        %vm601 = vcmp.gt.f32.partialorder %v531, 0.0
        %vm602 = vcmp.gt.f32.partialorder %v533, 0.0
        %vm603 = vcmp.gt.f32.partialorder %v536, 0.0
        %vm604 = vcmp.gt.f32.partialorder %v538, 0.0
        %vm605 = vcmp.gt.f32.partialorder %v541, 0.0
        %vm606 = vcmp.gt.f32.partialorder %v543, 0.0
        %vm607 = vcmp.gt.f32.partialorder %v546, 0.0
        %vm608 = vcmp.gt.f32.partialorder %v548, 0.0
        %vm609 = vcmp.gt.f32.partialorder %v551, 0.0
        %vm610 = vcmp.gt.f32.partialorder %v553, 0.0
        %vm611 = vcmp.gt.f32.partialorder %v556, 0.0
        %vm612 = vcmp.gt.f32.partialorder %v558, 0.0
        %vm613 = vcmp.gt.f32.partialorder %v561, 0.0
        %vm614 = vcmp.gt.f32.partialorder %v563, 0.0
        %vm615 = vcmp.gt.f32.partialorder %v566, 0.0
        %vm616 = vcmp.gt.f32.partialorder %v568, 0.0
        %vm617 = vcmp.gt.f32.partialorder %v571, 0.0
        %vm618 = vcmp.gt.f32.partialorder %v573, 0.0
        %vm619 = vcmp.gt.f32.partialorder %v576, 0.0
        %vm620 = vcmp.gt.f32.partialorder %v578, 0.0
        %vm621 = vcmp.gt.f32.partialorder %v581, 0.0
        %vm622 = vcmp.gt.f32.partialorder %v583, 0.0
        %vm623 = vcmp.gt.f32.partialorder %v586, 0.0
        %vm624 = vcmp.gt.f32.partialorder %v588, 0.0
        %vm625 = vcmp.gt.f32.partialorder %v591, 0.0
        %vm626 = vcmp.gt.f32.partialorder %v593, 0.0
        %v627 = vmul.f32 %v516, 0.01
        %v628 = vmul.f32 %v518, 0.01
        %v629 = vmul.f32 %v521, 0.01
        %v630 = vmul.f32 %v523, 0.01
        %v631 = vmul.f32 %v526, 0.01
        %v632 = vmul.f32 %v528, 0.01
        %v633 = vmul.f32 %v531, 0.01
        %v634 = vmul.f32 %v533, 0.01
        %v635 = vmul.f32 %v536, 0.01
        %v636 = vmul.f32 %v538, 0.01
        %v637 = vmul.f32 %v541, 0.01
        %v638 = vmul.f32 %v543, 0.01
        %v639 = vmul.f32 %v546, 0.01
        %v640 = vmul.f32 %v548, 0.01
        %v641 = vmul.f32 %v551, 0.01
        %v642 = vmul.f32 %v553, 0.01
        %v643 = vmul.f32 %v556, 0.01
        %v644 = vmul.f32 %v558, 0.01
        %v645 = vmul.f32 %v561, 0.01
        %v646 = vmul.f32 %v563, 0.01
        %v647 = vmul.f32 %v566, 0.01
        %v648 = vmul.f32 %v568, 0.01
        %v649 = vmul.f32 %v571, 0.01
        %v650 = vmul.f32 %v573, 0.01
        %v651 = vmul.f32 %v576, 0.01
        %v652 = vmul.f32 %v578, 0.01
        %v653 = vmul.f32 %v581, 0.01
        %v654 = vmul.f32 %v583, 0.01
        %v655 = vmul.f32 %v586, 0.01
        %v656 = vmul.f32 %v588, 0.01
        %v657 = vmul.f32 %v591, 0.01
        %v658 = vmul.f32 %v593, 0.01
        %v659 = vsel %vm595, %v516, %v627
        %v660 = vsel %vm596, %v518, %v628
        %v661 = vsel %vm597, %v521, %v629
        %v662 = vsel %vm598, %v523, %v630
        %v663 = vsel %vm599, %v526, %v631
        %v664 = vsel %vm600, %v528, %v632
        %v665 = vsel %vm601, %v531, %v633
        %v666 = vsel %vm602, %v533, %v634
        %v667 = vsel %vm603, %v536, %v635
        %v668 = vsel %vm604, %v538, %v636
        %v669 = vsel %vm605, %v541, %v637
        %v670 = vsel %vm606, %v543, %v638
        %v671 = vsel %vm607, %v546, %v639
        %v672 = vsel %vm608, %v548, %v640
        %v673 = vsel %vm609, %v551, %v641
        %v674 = vsel %vm610, %v553, %v642
        %v675 = vsel %vm611, %v556, %v643
        %v676 = vsel %vm612, %v558, %v644
        %v677 = vsel %vm613, %v561, %v645
        %v678 = vsel %vm614, %v563, %v646
        %v679 = vsel %vm615, %v566, %v647
        %v680 = vsel %vm616, %v568, %v648
        %v681 = vsel %vm617, %v571, %v649
        %v682 = vsel %vm618, %v573, %v650
        %v683 = vsel %vm619, %v576, %v651
        %v684 = vsel %vm620, %v578, %v652
        %v685 = vsel %vm621, %v581, %v653
        %v686 = vsel %vm622, %v583, %v654
        %v687 = vsel %vm623, %v586, %v655
        %v688 = vsel %vm624, %v588, %v656
        %v689 = vsel %vm625, %v591, %v657
        %v690 = vsel %vm626, %v593, %v658
        %v691 = vpack.c.bf16 %v660, %v659
        %v692 = vpack.c.bf16 %v662, %v661
        %v693 = vpack.c.bf16 %v664, %v663
        %v694 = vpack.c.bf16 %v666, %v665
        %v695 = vpack.c.bf16 %v668, %v667
        %v696 = vpack.c.bf16 %v670, %v669
        %v697 = vpack.c.bf16 %v672, %v671
        %v698 = vpack.c.bf16 %v674, %v673
        %v699 = vpack.c.bf16 %v676, %v675
        %v700 = vpack.c.bf16 %v678, %v677
        %v701 = vpack.c.bf16 %v680, %v679
        %v702 = vpack.c.bf16 %v682, %v681
        %v703 = vpack.c.bf16 %v684, %v683
        %v704 = vpack.c.bf16 %v686, %v685
        %v705 = vpack.c.bf16 %v688, %v687
        %v706 = vpack.c.bf16 %v690, %v689
        %v707 = vld [vmem:[%s3] sm:$0xf]
        %v708 = vld [vmem:[%s3 + $0x4] sm:$0xf]
        %v709 = vld [vmem:[%s3 + $0x8] sm:$0xf]
        %v710 = vld [vmem:[%s3 + $0xc] sm:$0xf]
        %v711 = vld [vmem:[%s3 + $0x10] sm:$0xf]
        %v712 = vld [vmem:[%s3 + $0x14] sm:$0xf]
        %v713 = vld [vmem:[%s3 + $0x18] sm:$0xf]
        %v714 = vld [vmem:[%s3 + $0x1c] sm:$0xf]
        %v715 = vld [vmem:[%s3 + $0x20] sm:$0xf]
        %v716 = vld [vmem:[%s3 + $0x24] sm:$0xf]
        %v717 = vld [vmem:[%s3 + $0x28] sm:$0xf]
        %v718 = vld [vmem:[%s3 + $0x2c] sm:$0xf]
        %v719 = vld [vmem:[%s3 + $0x30] sm:$0xf]
        %v720 = vld [vmem:[%s3 + $0x34] sm:$0xf]
        %v721 = vld [vmem:[%s3 + $0x38] sm:$0xf]
        %v722 = vld [vmem:[%s3 + $0x3c] sm:$0xf]
        %v723 = vld [vmem:[%s4] sm:$0x1]
        %v725 = vperm.slane %v723, 0
        %v743 = vunpack.c.l.b16 %v707
        %v744 = vunpack.c.l.b16 %v708
        %v745 = vunpack.c.l.b16 %v709
        %v746 = vunpack.c.l.b16 %v710
        %v747 = vunpack.c.l.b16 %v711
        %v748 = vunpack.c.l.b16 %v712
        %v749 = vunpack.c.l.b16 %v713
        %v750 = vunpack.c.l.b16 %v714
        %v751 = vunpack.c.l.b16 %v715
        %v752 = vunpack.c.l.b16 %v716
        %v753 = vunpack.c.l.b16 %v717
        %v754 = vunpack.c.l.b16 %v718
        %v755 = vunpack.c.l.b16 %v719
        %v756 = vunpack.c.l.b16 %v720
        %v757 = vunpack.c.l.b16 %v721
        %v758 = vunpack.c.l.b16 %v722
        %v759 = vpack.c.b16 %v744, %v743
        %v760 = vpack.c.b16 %v746, %v745
        %v761 = vpack.c.b16 %v748, %v747
        %v762 = vpack.c.b16 %v750, %v749
        %v763 = vpack.c.b16 %v752, %v751
        %v764 = vpack.c.b16 %v754, %v753
        %v765 = vpack.c.b16 %v756, %v755
        %v766 = vpack.c.b16 %v758, %v757
        %775 = vmatpush.bf16.msra.mxu0 %v766
        %776 = vmatpush.bf16.msra.mxu0 %v765
        %777 = vmatpush.bf16.msra.mxu0 %v764
        %778 = vmatpush.bf16.msra.mxu0 %v763
        %779 = vmatpush.bf16.msra.mxu0 %v762
        %780 = vmatpush.bf16.msra.mxu0 %v761
        %781 = vmatpush.bf16.msra.mxu0 %v760
        %782 = vmatpush.bf16.msra.mxu0 %v759
        %783 = vmatmul.bf16.gmra.mxu0 %v691
        %v784 = vpop.f32.mrf.mxu0
        %v785 = vadd.f32 %v725, %v784
        %v786 = vpop.f32.mrf.mxu0
        %v787 = vadd.f32 %v725, %v786
        %788 = vmatmul.bf16.gmra.mxu0 %v692
        %v789 = vpop.f32.mrf.mxu0
        %v790 = vadd.f32 %v725, %v789
        %v791 = vpop.f32.mrf.mxu0
        %v792 = vadd.f32 %v725, %v791
        %793 = vmatmul.bf16.gmra.mxu0 %v693
        %v794 = vpop.f32.mrf.mxu0
        %v795 = vadd.f32 %v725, %v794
        %v796 = vpop.f32.mrf.mxu0
        %v797 = vadd.f32 %v725, %v796
        %798 = vmatmul.bf16.gmra.mxu0 %v694
        %v799 = vpop.f32.mrf.mxu0
        %v800 = vadd.f32 %v725, %v799
        %v801 = vpop.f32.mrf.mxu0
        %v802 = vadd.f32 %v725, %v801
        %803 = vmatmul.bf16.gmra.mxu0 %v695
        %v804 = vpop.f32.mrf.mxu0
        %v805 = vadd.f32 %v725, %v804
        %v806 = vpop.f32.mrf.mxu0
        %v807 = vadd.f32 %v725, %v806
        %808 = vmatmul.bf16.gmra.mxu0 %v696
        %v809 = vpop.f32.mrf.mxu0
        %v810 = vadd.f32 %v725, %v809
        %v811 = vpop.f32.mrf.mxu0
        %v812 = vadd.f32 %v725, %v811
        %813 = vmatmul.bf16.gmra.mxu0 %v697
        %v814 = vpop.f32.mrf.mxu0
        %v815 = vadd.f32 %v725, %v814
        %v816 = vpop.f32.mrf.mxu0
        %v817 = vadd.f32 %v725, %v816
        %818 = vmatmul.bf16.gmra.mxu0 %v698
        %v819 = vpop.f32.mrf.mxu0
        %v820 = vadd.f32 %v725, %v819
        %v821 = vpop.f32.mrf.mxu0
        %v822 = vadd.f32 %v725, %v821
        %823 = vmatmul.bf16.gmra.mxu0 %v699
        %v824 = vpop.f32.mrf.mxu0
        %v825 = vadd.f32 %v725, %v824
        %v826 = vpop.f32.mrf.mxu0
        %v827 = vadd.f32 %v725, %v826
        %828 = vmatmul.bf16.gmra.mxu0 %v700
        %v829 = vpop.f32.mrf.mxu0
        %v830 = vadd.f32 %v725, %v829
        %v831 = vpop.f32.mrf.mxu0
        %v832 = vadd.f32 %v725, %v831
        %833 = vmatmul.bf16.gmra.mxu0 %v701
        %v834 = vpop.f32.mrf.mxu0
        %v835 = vadd.f32 %v725, %v834
        %v836 = vpop.f32.mrf.mxu0
        %v837 = vadd.f32 %v725, %v836
        %838 = vmatmul.bf16.gmra.mxu0 %v702
        %v839 = vpop.f32.mrf.mxu0
        %v840 = vadd.f32 %v725, %v839
        %v841 = vpop.f32.mrf.mxu0
        %v842 = vadd.f32 %v725, %v841
        %843 = vmatmul.bf16.gmra.mxu0 %v703
        %v844 = vpop.f32.mrf.mxu0
        %v845 = vadd.f32 %v725, %v844
        %v846 = vpop.f32.mrf.mxu0
        %v847 = vadd.f32 %v725, %v846
        %848 = vmatmul.bf16.gmra.mxu0 %v704
        %v849 = vpop.f32.mrf.mxu0
        %v850 = vadd.f32 %v725, %v849
        %v851 = vpop.f32.mrf.mxu0
        %v852 = vadd.f32 %v725, %v851
        %853 = vmatmul.bf16.gmra.mxu0 %v705
        %v854 = vpop.f32.mrf.mxu0
        %v855 = vadd.f32 %v725, %v854
        %v856 = vpop.f32.mrf.mxu0
        %v857 = vadd.f32 %v725, %v856
        %858 = vmatmul.bf16.gmra.mxu0 %v706
        %v859 = vpop.f32.mrf.mxu0
        %v860 = vadd.f32 %v725, %v859
        %v861 = vpop.f32.mrf.mxu0
        %v862 = vadd.f32 %v725, %v861
        %863 = vdwg.mxu0
        %vm864 = vcmp.gt.f32.partialorder %v785, 0.0
        %vm865 = vcmp.gt.f32.partialorder %v787, 0.0
        %vm866 = vcmp.gt.f32.partialorder %v790, 0.0
        %vm867 = vcmp.gt.f32.partialorder %v792, 0.0
        %vm868 = vcmp.gt.f32.partialorder %v795, 0.0
        %vm869 = vcmp.gt.f32.partialorder %v797, 0.0
        %vm870 = vcmp.gt.f32.partialorder %v800, 0.0
        %vm871 = vcmp.gt.f32.partialorder %v802, 0.0
        %vm872 = vcmp.gt.f32.partialorder %v805, 0.0
        %vm873 = vcmp.gt.f32.partialorder %v807, 0.0
        %vm874 = vcmp.gt.f32.partialorder %v810, 0.0
        %vm875 = vcmp.gt.f32.partialorder %v812, 0.0
        %vm876 = vcmp.gt.f32.partialorder %v815, 0.0
        %vm877 = vcmp.gt.f32.partialorder %v817, 0.0
        %vm878 = vcmp.gt.f32.partialorder %v820, 0.0
        %vm879 = vcmp.gt.f32.partialorder %v822, 0.0
        %vm880 = vcmp.gt.f32.partialorder %v825, 0.0
        %vm881 = vcmp.gt.f32.partialorder %v827, 0.0
        %vm882 = vcmp.gt.f32.partialorder %v830, 0.0
        %vm883 = vcmp.gt.f32.partialorder %v832, 0.0
        %vm884 = vcmp.gt.f32.partialorder %v835, 0.0
        %vm885 = vcmp.gt.f32.partialorder %v837, 0.0
        %vm886 = vcmp.gt.f32.partialorder %v840, 0.0
        %vm887 = vcmp.gt.f32.partialorder %v842, 0.0
        %vm888 = vcmp.gt.f32.partialorder %v845, 0.0
        %vm889 = vcmp.gt.f32.partialorder %v847, 0.0
        %vm890 = vcmp.gt.f32.partialorder %v850, 0.0
        %vm891 = vcmp.gt.f32.partialorder %v852, 0.0
        %vm892 = vcmp.gt.f32.partialorder %v855, 0.0
        %vm893 = vcmp.gt.f32.partialorder %v857, 0.0
        %vm894 = vcmp.gt.f32.partialorder %v860, 0.0
        %vm895 = vcmp.gt.f32.partialorder %v862, 0.0
        %v896 = vmul.f32 %v785, 0.01
        %v897 = vmul.f32 %v787, 0.01
        %v898 = vmul.f32 %v790, 0.01
        %v899 = vmul.f32 %v792, 0.01
        %v900 = vmul.f32 %v795, 0.01
        %v901 = vmul.f32 %v797, 0.01
        %v902 = vmul.f32 %v800, 0.01
        %v903 = vmul.f32 %v802, 0.01
        %v904 = vmul.f32 %v805, 0.01
        %v905 = vmul.f32 %v807, 0.01
        %v906 = vmul.f32 %v810, 0.01
        %v907 = vmul.f32 %v812, 0.01
        %v908 = vmul.f32 %v815, 0.01
        %v909 = vmul.f32 %v817, 0.01
        %v910 = vmul.f32 %v820, 0.01
        %v911 = vmul.f32 %v822, 0.01
        %v912 = vmul.f32 %v825, 0.01
        %v913 = vmul.f32 %v827, 0.01
        %v914 = vmul.f32 %v830, 0.01
        %v915 = vmul.f32 %v832, 0.01
        %v916 = vmul.f32 %v835, 0.01
        %v917 = vmul.f32 %v837, 0.01
        %v918 = vmul.f32 %v840, 0.01
        %v919 = vmul.f32 %v842, 0.01
        %v920 = vmul.f32 %v845, 0.01
        %v921 = vmul.f32 %v847, 0.01
        %v922 = vmul.f32 %v850, 0.01
        %v923 = vmul.f32 %v852, 0.01
        %v924 = vmul.f32 %v855, 0.01
        %v925 = vmul.f32 %v857, 0.01
        %v926 = vmul.f32 %v860, 0.01
        %v927 = vmul.f32 %v862, 0.01
        %v928 = vsel %vm864, %v785, %v896
        %v929 = vsel %vm865, %v787, %v897
        %v930 = vsel %vm866, %v790, %v898
        %v931 = vsel %vm867, %v792, %v899
        %v932 = vsel %vm868, %v795, %v900
        %v933 = vsel %vm869, %v797, %v901
        %v934 = vsel %vm870, %v800, %v902
        %v935 = vsel %vm871, %v802, %v903
        %v936 = vsel %vm872, %v805, %v904
        %v937 = vsel %vm873, %v807, %v905
        %v938 = vsel %vm874, %v810, %v906
        %v939 = vsel %vm875, %v812, %v907
        %v940 = vsel %vm876, %v815, %v908
        %v941 = vsel %vm877, %v817, %v909
        %v942 = vsel %vm878, %v820, %v910
        %v943 = vsel %vm879, %v822, %v911
        %v944 = vsel %vm880, %v825, %v912
        %v945 = vsel %vm881, %v827, %v913
        %v946 = vsel %vm882, %v830, %v914
        %v947 = vsel %vm883, %v832, %v915
        %v948 = vsel %vm884, %v835, %v916
        %v949 = vsel %vm885, %v837, %v917
        %v950 = vsel %vm886, %v840, %v918
        %v951 = vsel %vm887, %v842, %v919
        %v952 = vsel %vm888, %v845, %v920
        %v953 = vsel %vm889, %v847, %v921
        %v954 = vsel %vm890, %v850, %v922
        %v955 = vsel %vm891, %v852, %v923
        %v956 = vsel %vm892, %v855, %v924
        %v957 = vsel %vm893, %v857, %v925
        %v958 = vsel %vm894, %v860, %v926
        %v959 = vsel %vm895, %v862, %v927
        %v960 = vpack.c.bf16 %v929, %v928
        %v961 = vpack.c.bf16 %v931, %v930
        %v962 = vpack.c.bf16 %v933, %v932
        %v963 = vpack.c.bf16 %v935, %v934
        %v964 = vpack.c.bf16 %v937, %v936
        %v965 = vpack.c.bf16 %v939, %v938
        %v966 = vpack.c.bf16 %v941, %v940
        %v967 = vpack.c.bf16 %v943, %v942
        %v968 = vpack.c.bf16 %v945, %v944
        %v969 = vpack.c.bf16 %v947, %v946
        %v970 = vpack.c.bf16 %v949, %v948
        %v971 = vpack.c.bf16 %v951, %v950
        %v972 = vpack.c.bf16 %v953, %v952
        %v973 = vpack.c.bf16 %v955, %v954
        %v974 = vpack.c.bf16 %v957, %v956
        %v975 = vpack.c.bf16 %v959, %v958
        %v976 = vld [vmem:[%s5] sm:$0xf]
        %v977 = vld [vmem:[%s5 + $0x4] sm:$0xf]
        %v978 = vld [vmem:[%s5 + $0x8] sm:$0xf]
        %v979 = vld [vmem:[%s5 + $0xc] sm:$0xf]
        %v980 = vld [vmem:[%s5 + $0x10] sm:$0xf]
        %v981 = vld [vmem:[%s5 + $0x14] sm:$0xf]
        %v982 = vld [vmem:[%s5 + $0x18] sm:$0xf]
        %v983 = vld [vmem:[%s5 + $0x1c] sm:$0xf]
        %v984 = vld [vmem:[%s5 + $0x20] sm:$0xf]
        %v985 = vld [vmem:[%s5 + $0x24] sm:$0xf]
        %v986 = vld [vmem:[%s5 + $0x28] sm:$0xf]
        %v987 = vld [vmem:[%s5 + $0x2c] sm:$0xf]
        %v988 = vld [vmem:[%s5 + $0x30] sm:$0xf]
        %v989 = vld [vmem:[%s5 + $0x34] sm:$0xf]
        %v990 = vld [vmem:[%s5 + $0x38] sm:$0xf]
        %v991 = vld [vmem:[%s5 + $0x3c] sm:$0xf]
        %v992 = vld [vmem:[%s6] sm:$0x1]
        %v994 = vperm.slane %v992, 0
        %v1012 = vunpack.c.l.b16 %v976
        %v1013 = vunpack.c.l.b16 %v977
        %v1014 = vunpack.c.l.b16 %v978
        %v1015 = vunpack.c.l.b16 %v979
        %v1016 = vunpack.c.l.b16 %v980
        %v1017 = vunpack.c.l.b16 %v981
        %v1018 = vunpack.c.l.b16 %v982
        %v1019 = vunpack.c.l.b16 %v983
        %v1020 = vunpack.c.l.b16 %v984
        %v1021 = vunpack.c.l.b16 %v985
        %v1022 = vunpack.c.l.b16 %v986
        %v1023 = vunpack.c.l.b16 %v987
        %v1024 = vunpack.c.l.b16 %v988
        %v1025 = vunpack.c.l.b16 %v989
        %v1026 = vunpack.c.l.b16 %v990
        %v1027 = vunpack.c.l.b16 %v991
        %v1028 = vpack.c.b16 %v1013, %v1012
        %v1029 = vpack.c.b16 %v1015, %v1014
        %v1030 = vpack.c.b16 %v1017, %v1016
        %v1031 = vpack.c.b16 %v1019, %v1018
        %v1032 = vpack.c.b16 %v1021, %v1020
        %v1033 = vpack.c.b16 %v1023, %v1022
        %v1034 = vpack.c.b16 %v1025, %v1024
        %v1035 = vpack.c.b16 %v1027, %v1026
        %1044 = vmatpush.bf16.msra.mxu0 %v1035
        %1045 = vmatpush.bf16.msra.mxu0 %v1034
        %1046 = vmatpush.bf16.msra.mxu0 %v1033
        %1047 = vmatpush.bf16.msra.mxu0 %v1032
        %1048 = vmatpush.bf16.msra.mxu0 %v1031
        %1049 = vmatpush.bf16.msra.mxu0 %v1030
        %1050 = vmatpush.bf16.msra.mxu0 %v1029
        %1051 = vmatpush.bf16.msra.mxu0 %v1028
        %1052 = vmatmul.bf16.gmra.mxu0 %v960
        %v1053 = vpop.f32.mrf.mxu0
        %v1054 = vadd.f32 %v994, %v1053
        %v1055 = vpop.f32.mrf.mxu0
        %v1056 = vadd.f32 %v994, %v1055
        %1057 = vmatmul.bf16.gmra.mxu0 %v961
        %v1058 = vpop.f32.mrf.mxu0
        %v1059 = vadd.f32 %v994, %v1058
        %v1060 = vpop.f32.mrf.mxu0
        %v1061 = vadd.f32 %v994, %v1060
        %1062 = vmatmul.bf16.gmra.mxu0 %v962
        %v1063 = vpop.f32.mrf.mxu0
        %v1064 = vadd.f32 %v994, %v1063
        %v1065 = vpop.f32.mrf.mxu0
        %v1066 = vadd.f32 %v994, %v1065
        %1067 = vmatmul.bf16.gmra.mxu0 %v963
        %v1068 = vpop.f32.mrf.mxu0
        %v1069 = vadd.f32 %v994, %v1068
        %v1070 = vpop.f32.mrf.mxu0
        %v1071 = vadd.f32 %v994, %v1070
        %1072 = vmatmul.bf16.gmra.mxu0 %v964
        %v1073 = vpop.f32.mrf.mxu0
        %v1074 = vadd.f32 %v994, %v1073
        %v1075 = vpop.f32.mrf.mxu0
        %v1076 = vadd.f32 %v994, %v1075
        %1077 = vmatmul.bf16.gmra.mxu0 %v965
        %v1078 = vpop.f32.mrf.mxu0
        %v1079 = vadd.f32 %v994, %v1078
        %v1080 = vpop.f32.mrf.mxu0
        %v1081 = vadd.f32 %v994, %v1080
        %1082 = vmatmul.bf16.gmra.mxu0 %v966
        %v1083 = vpop.f32.mrf.mxu0
        %v1084 = vadd.f32 %v994, %v1083
        %v1085 = vpop.f32.mrf.mxu0
        %v1086 = vadd.f32 %v994, %v1085
        %1087 = vmatmul.bf16.gmra.mxu0 %v967
        %v1088 = vpop.f32.mrf.mxu0
        %v1089 = vadd.f32 %v994, %v1088
        %v1090 = vpop.f32.mrf.mxu0
        %v1091 = vadd.f32 %v994, %v1090
        %1092 = vmatmul.bf16.gmra.mxu0 %v968
        %v1093 = vpop.f32.mrf.mxu0
        %v1094 = vadd.f32 %v994, %v1093
        %v1095 = vpop.f32.mrf.mxu0
        %v1096 = vadd.f32 %v994, %v1095
        %1097 = vmatmul.bf16.gmra.mxu0 %v969
        %v1098 = vpop.f32.mrf.mxu0
        %v1099 = vadd.f32 %v994, %v1098
        %v1100 = vpop.f32.mrf.mxu0
        %v1101 = vadd.f32 %v994, %v1100
        %1102 = vmatmul.bf16.gmra.mxu0 %v970
        %v1103 = vpop.f32.mrf.mxu0
        %v1104 = vadd.f32 %v994, %v1103
        %v1105 = vpop.f32.mrf.mxu0
        %v1106 = vadd.f32 %v994, %v1105
        %1107 = vmatmul.bf16.gmra.mxu0 %v971
        %v1108 = vpop.f32.mrf.mxu0
        %v1109 = vadd.f32 %v994, %v1108
        %v1110 = vpop.f32.mrf.mxu0
        %v1111 = vadd.f32 %v994, %v1110
        %1112 = vmatmul.bf16.gmra.mxu0 %v972
        %v1113 = vpop.f32.mrf.mxu0
        %v1114 = vadd.f32 %v994, %v1113
        %v1115 = vpop.f32.mrf.mxu0
        %v1116 = vadd.f32 %v994, %v1115
        %1117 = vmatmul.bf16.gmra.mxu0 %v973
        %v1118 = vpop.f32.mrf.mxu0
        %v1119 = vadd.f32 %v994, %v1118
        %v1120 = vpop.f32.mrf.mxu0
        %v1121 = vadd.f32 %v994, %v1120
        %1122 = vmatmul.bf16.gmra.mxu0 %v974
        %v1123 = vpop.f32.mrf.mxu0
        %v1124 = vadd.f32 %v994, %v1123
        %v1125 = vpop.f32.mrf.mxu0
        %v1126 = vadd.f32 %v994, %v1125
        %1127 = vmatmul.bf16.gmra.mxu0 %v975
        %v1128 = vpop.f32.mrf.mxu0
        %v1129 = vadd.f32 %v994, %v1128
        %v1130 = vpop.f32.mrf.mxu0
        %v1131 = vadd.f32 %v994, %v1130
        %1132 = vdwg.mxu0
        %vm1133 = vcmp.gt.f32.partialorder %v1054, 0.0
        %vm1134 = vcmp.gt.f32.partialorder %v1056, 0.0
        %vm1135 = vcmp.gt.f32.partialorder %v1059, 0.0
        %vm1136 = vcmp.gt.f32.partialorder %v1061, 0.0
        %vm1137 = vcmp.gt.f32.partialorder %v1064, 0.0
        %vm1138 = vcmp.gt.f32.partialorder %v1066, 0.0
        %vm1139 = vcmp.gt.f32.partialorder %v1069, 0.0
        %vm1140 = vcmp.gt.f32.partialorder %v1071, 0.0
        %vm1141 = vcmp.gt.f32.partialorder %v1074, 0.0
        %vm1142 = vcmp.gt.f32.partialorder %v1076, 0.0
        %vm1143 = vcmp.gt.f32.partialorder %v1079, 0.0
        %vm1144 = vcmp.gt.f32.partialorder %v1081, 0.0
        %vm1145 = vcmp.gt.f32.partialorder %v1084, 0.0
        %vm1146 = vcmp.gt.f32.partialorder %v1086, 0.0
        %vm1147 = vcmp.gt.f32.partialorder %v1089, 0.0
        %vm1148 = vcmp.gt.f32.partialorder %v1091, 0.0
        %vm1149 = vcmp.gt.f32.partialorder %v1094, 0.0
        %vm1150 = vcmp.gt.f32.partialorder %v1096, 0.0
        %vm1151 = vcmp.gt.f32.partialorder %v1099, 0.0
        %vm1152 = vcmp.gt.f32.partialorder %v1101, 0.0
        %vm1153 = vcmp.gt.f32.partialorder %v1104, 0.0
        %vm1154 = vcmp.gt.f32.partialorder %v1106, 0.0
        %vm1155 = vcmp.gt.f32.partialorder %v1109, 0.0
        %vm1156 = vcmp.gt.f32.partialorder %v1111, 0.0
        %vm1157 = vcmp.gt.f32.partialorder %v1114, 0.0
        %vm1158 = vcmp.gt.f32.partialorder %v1116, 0.0
        %vm1159 = vcmp.gt.f32.partialorder %v1119, 0.0
        %vm1160 = vcmp.gt.f32.partialorder %v1121, 0.0
        %vm1161 = vcmp.gt.f32.partialorder %v1124, 0.0
        %vm1162 = vcmp.gt.f32.partialorder %v1126, 0.0
        %vm1163 = vcmp.gt.f32.partialorder %v1129, 0.0
        %vm1164 = vcmp.gt.f32.partialorder %v1131, 0.0
        %v1165 = vmul.f32 %v1054, 0.01
        %v1166 = vmul.f32 %v1056, 0.01
        %v1167 = vmul.f32 %v1059, 0.01
        %v1168 = vmul.f32 %v1061, 0.01
        %v1169 = vmul.f32 %v1064, 0.01
        %v1170 = vmul.f32 %v1066, 0.01
        %v1171 = vmul.f32 %v1069, 0.01
        %v1172 = vmul.f32 %v1071, 0.01
        %v1173 = vmul.f32 %v1074, 0.01
        %v1174 = vmul.f32 %v1076, 0.01
        %v1175 = vmul.f32 %v1079, 0.01
        %v1176 = vmul.f32 %v1081, 0.01
        %v1177 = vmul.f32 %v1084, 0.01
        %v1178 = vmul.f32 %v1086, 0.01
        %v1179 = vmul.f32 %v1089, 0.01
        %v1180 = vmul.f32 %v1091, 0.01
        %v1181 = vmul.f32 %v1094, 0.01
        %v1182 = vmul.f32 %v1096, 0.01
        %v1183 = vmul.f32 %v1099, 0.01
        %v1184 = vmul.f32 %v1101, 0.01
        %v1185 = vmul.f32 %v1104, 0.01
        %v1186 = vmul.f32 %v1106, 0.01
        %v1187 = vmul.f32 %v1109, 0.01
        %v1188 = vmul.f32 %v1111, 0.01
        %v1189 = vmul.f32 %v1114, 0.01
        %v1190 = vmul.f32 %v1116, 0.01
        %v1191 = vmul.f32 %v1119, 0.01
        %v1192 = vmul.f32 %v1121, 0.01
        %v1193 = vmul.f32 %v1124, 0.01
        %v1194 = vmul.f32 %v1126, 0.01
        %v1195 = vmul.f32 %v1129, 0.01
        %v1196 = vmul.f32 %v1131, 0.01
        %v1197 = vsel %vm1133, %v1054, %v1165
        %v1198 = vsel %vm1134, %v1056, %v1166
        %v1199 = vsel %vm1135, %v1059, %v1167
        %v1200 = vsel %vm1136, %v1061, %v1168
        %v1201 = vsel %vm1137, %v1064, %v1169
        %v1202 = vsel %vm1138, %v1066, %v1170
        %v1203 = vsel %vm1139, %v1069, %v1171
        %v1204 = vsel %vm1140, %v1071, %v1172
        %v1205 = vsel %vm1141, %v1074, %v1173
        %v1206 = vsel %vm1142, %v1076, %v1174
        %v1207 = vsel %vm1143, %v1079, %v1175
        %v1208 = vsel %vm1144, %v1081, %v1176
        %v1209 = vsel %vm1145, %v1084, %v1177
        %v1210 = vsel %vm1146, %v1086, %v1178
        %v1211 = vsel %vm1147, %v1089, %v1179
        %v1212 = vsel %vm1148, %v1091, %v1180
        %v1213 = vsel %vm1149, %v1094, %v1181
        %v1214 = vsel %vm1150, %v1096, %v1182
        %v1215 = vsel %vm1151, %v1099, %v1183
        %v1216 = vsel %vm1152, %v1101, %v1184
        %v1217 = vsel %vm1153, %v1104, %v1185
        %v1218 = vsel %vm1154, %v1106, %v1186
        %v1219 = vsel %vm1155, %v1109, %v1187
        %v1220 = vsel %vm1156, %v1111, %v1188
        %v1221 = vsel %vm1157, %v1114, %v1189
        %v1222 = vsel %vm1158, %v1116, %v1190
        %v1223 = vsel %vm1159, %v1119, %v1191
        %v1224 = vsel %vm1160, %v1121, %v1192
        %v1225 = vsel %vm1161, %v1124, %v1193
        %v1226 = vsel %vm1162, %v1126, %v1194
        %v1227 = vsel %vm1163, %v1129, %v1195
        %v1228 = vsel %vm1164, %v1131, %v1196
        %v1229 = vpack.c.bf16 %v1198, %v1197
        %v1230 = vpack.c.bf16 %v1200, %v1199
        %v1231 = vpack.c.bf16 %v1202, %v1201
        %v1232 = vpack.c.bf16 %v1204, %v1203
        %v1233 = vpack.c.bf16 %v1206, %v1205
        %v1234 = vpack.c.bf16 %v1208, %v1207
        %v1235 = vpack.c.bf16 %v1210, %v1209
        %v1236 = vpack.c.bf16 %v1212, %v1211
        %v1237 = vpack.c.bf16 %v1214, %v1213
        %v1238 = vpack.c.bf16 %v1216, %v1215
        %v1239 = vpack.c.bf16 %v1218, %v1217
        %v1240 = vpack.c.bf16 %v1220, %v1219
        %v1241 = vpack.c.bf16 %v1222, %v1221
        %v1242 = vpack.c.bf16 %v1224, %v1223
        %v1243 = vpack.c.bf16 %v1226, %v1225
        %v1244 = vpack.c.bf16 %v1228, %v1227
        %v1245 = vld [vmem:[%s7] sm:$0xf]
        %v1246 = vld [vmem:[%s7 + $0x4] sm:$0xf]
        %v1247 = vld [vmem:[%s7 + $0x8] sm:$0xf]
        %v1248 = vld [vmem:[%s7 + $0xc] sm:$0xf]
        %v1249 = vld [vmem:[%s7 + $0x10] sm:$0xf]
        %v1250 = vld [vmem:[%s7 + $0x14] sm:$0xf]
        %v1251 = vld [vmem:[%s7 + $0x18] sm:$0xf]
        %v1252 = vld [vmem:[%s7 + $0x1c] sm:$0xf]
        %v1253 = vld [vmem:[%s7 + $0x20] sm:$0xf]
        %v1254 = vld [vmem:[%s7 + $0x24] sm:$0xf]
        %v1255 = vld [vmem:[%s7 + $0x28] sm:$0xf]
        %v1256 = vld [vmem:[%s7 + $0x2c] sm:$0xf]
        %v1257 = vld [vmem:[%s7 + $0x30] sm:$0xf]
        %v1258 = vld [vmem:[%s7 + $0x34] sm:$0xf]
        %v1259 = vld [vmem:[%s7 + $0x38] sm:$0xf]
        %v1260 = vld [vmem:[%s7 + $0x3c] sm:$0xf]
        %v1261 = vld [vmem:[%s8] sm:$0x1]
        %v1263 = vperm.slane %v1261, 0
        %v1281 = vunpack.c.l.b16 %v1245
        %v1282 = vunpack.c.l.b16 %v1246
        %v1283 = vunpack.c.l.b16 %v1247
        %v1284 = vunpack.c.l.b16 %v1248
        %v1285 = vunpack.c.l.b16 %v1249
        %v1286 = vunpack.c.l.b16 %v1250
        %v1287 = vunpack.c.l.b16 %v1251
        %v1288 = vunpack.c.l.b16 %v1252
        %v1289 = vunpack.c.l.b16 %v1253
        %v1290 = vunpack.c.l.b16 %v1254
        %v1291 = vunpack.c.l.b16 %v1255
        %v1292 = vunpack.c.l.b16 %v1256
        %v1293 = vunpack.c.l.b16 %v1257
        %v1294 = vunpack.c.l.b16 %v1258
        %v1295 = vunpack.c.l.b16 %v1259
        %v1296 = vunpack.c.l.b16 %v1260
        %v1297 = vpack.c.b16 %v1282, %v1281
        %v1298 = vpack.c.b16 %v1284, %v1283
        %v1299 = vpack.c.b16 %v1286, %v1285
        %v1300 = vpack.c.b16 %v1288, %v1287
        %v1301 = vpack.c.b16 %v1290, %v1289
        %v1302 = vpack.c.b16 %v1292, %v1291
        %v1303 = vpack.c.b16 %v1294, %v1293
        %v1304 = vpack.c.b16 %v1296, %v1295
        %1313 = vmatpush.bf16.msra.mxu0 %v1304
        %1314 = vmatpush.bf16.msra.mxu0 %v1303
        %1315 = vmatpush.bf16.msra.mxu0 %v1302
        %1316 = vmatpush.bf16.msra.mxu0 %v1301
        %1317 = vmatpush.bf16.msra.mxu0 %v1300
        %1318 = vmatpush.bf16.msra.mxu0 %v1299
        %1319 = vmatpush.bf16.msra.mxu0 %v1298
        %1320 = vmatpush.bf16.msra.mxu0 %v1297
        %1321 = vmatmul.bf16.gmra.mxu0 %v1229
        %v1322 = vpop.f32.mrf.mxu0
        %v1323 = vadd.f32 %v1263, %v1322
        %v1324 = vpop.f32.mrf.mxu0
        %v1325 = vadd.f32 %v1263, %v1324
        %1326 = vmatmul.bf16.gmra.mxu0 %v1230
        %v1327 = vpop.f32.mrf.mxu0
        %v1328 = vadd.f32 %v1263, %v1327
        %v1329 = vpop.f32.mrf.mxu0
        %v1330 = vadd.f32 %v1263, %v1329
        %1331 = vmatmul.bf16.gmra.mxu0 %v1231
        %v1332 = vpop.f32.mrf.mxu0
        %v1333 = vadd.f32 %v1263, %v1332
        %v1334 = vpop.f32.mrf.mxu0
        %v1335 = vadd.f32 %v1263, %v1334
        %1336 = vmatmul.bf16.gmra.mxu0 %v1232
        %v1337 = vpop.f32.mrf.mxu0
        %v1338 = vadd.f32 %v1263, %v1337
        %v1339 = vpop.f32.mrf.mxu0
        %v1340 = vadd.f32 %v1263, %v1339
        %1341 = vmatmul.bf16.gmra.mxu0 %v1233
        %v1342 = vpop.f32.mrf.mxu0
        %v1343 = vadd.f32 %v1263, %v1342
        %v1344 = vpop.f32.mrf.mxu0
        %v1345 = vadd.f32 %v1263, %v1344
        %1346 = vmatmul.bf16.gmra.mxu0 %v1234
        %v1347 = vpop.f32.mrf.mxu0
        %v1348 = vadd.f32 %v1263, %v1347
        %v1349 = vpop.f32.mrf.mxu0
        %v1350 = vadd.f32 %v1263, %v1349
        %1351 = vmatmul.bf16.gmra.mxu0 %v1235
        %v1352 = vpop.f32.mrf.mxu0
        %v1353 = vadd.f32 %v1263, %v1352
        %v1354 = vpop.f32.mrf.mxu0
        %v1355 = vadd.f32 %v1263, %v1354
        %1356 = vmatmul.bf16.gmra.mxu0 %v1236
        %v1357 = vpop.f32.mrf.mxu0
        %v1358 = vadd.f32 %v1263, %v1357
        %v1359 = vpop.f32.mrf.mxu0
        %v1360 = vadd.f32 %v1263, %v1359
        %1361 = vmatmul.bf16.gmra.mxu0 %v1237
        %v1362 = vpop.f32.mrf.mxu0
        %v1363 = vadd.f32 %v1263, %v1362
        %v1364 = vpop.f32.mrf.mxu0
        %v1365 = vadd.f32 %v1263, %v1364
        %1366 = vmatmul.bf16.gmra.mxu0 %v1238
        %v1367 = vpop.f32.mrf.mxu0
        %v1368 = vadd.f32 %v1263, %v1367
        %v1369 = vpop.f32.mrf.mxu0
        %v1370 = vadd.f32 %v1263, %v1369
        %1371 = vmatmul.bf16.gmra.mxu0 %v1239
        %v1372 = vpop.f32.mrf.mxu0
        %v1373 = vadd.f32 %v1263, %v1372
        %v1374 = vpop.f32.mrf.mxu0
        %v1375 = vadd.f32 %v1263, %v1374
        %1376 = vmatmul.bf16.gmra.mxu0 %v1240
        %v1377 = vpop.f32.mrf.mxu0
        %v1378 = vadd.f32 %v1263, %v1377
        %v1379 = vpop.f32.mrf.mxu0
        %v1380 = vadd.f32 %v1263, %v1379
        %1381 = vmatmul.bf16.gmra.mxu0 %v1241
        %v1382 = vpop.f32.mrf.mxu0
        %v1383 = vadd.f32 %v1263, %v1382
        %v1384 = vpop.f32.mrf.mxu0
        %v1385 = vadd.f32 %v1263, %v1384
        %1386 = vmatmul.bf16.gmra.mxu0 %v1242
        %v1387 = vpop.f32.mrf.mxu0
        %v1388 = vadd.f32 %v1263, %v1387
        %v1389 = vpop.f32.mrf.mxu0
        %v1390 = vadd.f32 %v1263, %v1389
        %1391 = vmatmul.bf16.gmra.mxu0 %v1243
        %v1392 = vpop.f32.mrf.mxu0
        %v1393 = vadd.f32 %v1263, %v1392
        %v1394 = vpop.f32.mrf.mxu0
        %v1395 = vadd.f32 %v1263, %v1394
        %1396 = vmatmul.bf16.gmra.mxu0 %v1244
        %v1397 = vpop.f32.mrf.mxu0
        %v1398 = vadd.f32 %v1263, %v1397
        %v1399 = vpop.f32.mrf.mxu0
        %v1400 = vadd.f32 %v1263, %v1399
        %1401 = vdwg.mxu0
        %vm1402 = vcmp.gt.f32.partialorder %v1323, 0.0
        %vm1403 = vcmp.gt.f32.partialorder %v1325, 0.0
        %vm1404 = vcmp.gt.f32.partialorder %v1328, 0.0
        %vm1405 = vcmp.gt.f32.partialorder %v1330, 0.0
        %vm1406 = vcmp.gt.f32.partialorder %v1333, 0.0
        %vm1407 = vcmp.gt.f32.partialorder %v1335, 0.0
        %vm1408 = vcmp.gt.f32.partialorder %v1338, 0.0
        %vm1409 = vcmp.gt.f32.partialorder %v1340, 0.0
        %vm1410 = vcmp.gt.f32.partialorder %v1343, 0.0
        %vm1411 = vcmp.gt.f32.partialorder %v1345, 0.0
        %vm1412 = vcmp.gt.f32.partialorder %v1348, 0.0
        %vm1413 = vcmp.gt.f32.partialorder %v1350, 0.0
        %vm1414 = vcmp.gt.f32.partialorder %v1353, 0.0
        %vm1415 = vcmp.gt.f32.partialorder %v1355, 0.0
        %vm1416 = vcmp.gt.f32.partialorder %v1358, 0.0
        %vm1417 = vcmp.gt.f32.partialorder %v1360, 0.0
        %vm1418 = vcmp.gt.f32.partialorder %v1363, 0.0
        %vm1419 = vcmp.gt.f32.partialorder %v1365, 0.0
        %vm1420 = vcmp.gt.f32.partialorder %v1368, 0.0
        %vm1421 = vcmp.gt.f32.partialorder %v1370, 0.0
        %vm1422 = vcmp.gt.f32.partialorder %v1373, 0.0
        %vm1423 = vcmp.gt.f32.partialorder %v1375, 0.0
        %vm1424 = vcmp.gt.f32.partialorder %v1378, 0.0
        %vm1425 = vcmp.gt.f32.partialorder %v1380, 0.0
        %vm1426 = vcmp.gt.f32.partialorder %v1383, 0.0
        %vm1427 = vcmp.gt.f32.partialorder %v1385, 0.0
        %vm1428 = vcmp.gt.f32.partialorder %v1388, 0.0
        %vm1429 = vcmp.gt.f32.partialorder %v1390, 0.0
        %vm1430 = vcmp.gt.f32.partialorder %v1393, 0.0
        %vm1431 = vcmp.gt.f32.partialorder %v1395, 0.0
        %vm1432 = vcmp.gt.f32.partialorder %v1398, 0.0
        %vm1433 = vcmp.gt.f32.partialorder %v1400, 0.0
        %v1434 = vmul.f32 %v1323, 0.01
        %v1435 = vmul.f32 %v1325, 0.01
        %v1436 = vmul.f32 %v1328, 0.01
        %v1437 = vmul.f32 %v1330, 0.01
        %v1438 = vmul.f32 %v1333, 0.01
        %v1439 = vmul.f32 %v1335, 0.01
        %v1440 = vmul.f32 %v1338, 0.01
        %v1441 = vmul.f32 %v1340, 0.01
        %v1442 = vmul.f32 %v1343, 0.01
        %v1443 = vmul.f32 %v1345, 0.01
        %v1444 = vmul.f32 %v1348, 0.01
        %v1445 = vmul.f32 %v1350, 0.01
        %v1446 = vmul.f32 %v1353, 0.01
        %v1447 = vmul.f32 %v1355, 0.01
        %v1448 = vmul.f32 %v1358, 0.01
        %v1449 = vmul.f32 %v1360, 0.01
        %v1450 = vmul.f32 %v1363, 0.01
        %v1451 = vmul.f32 %v1365, 0.01
        %v1452 = vmul.f32 %v1368, 0.01
        %v1453 = vmul.f32 %v1370, 0.01
        %v1454 = vmul.f32 %v1373, 0.01
        %v1455 = vmul.f32 %v1375, 0.01
        %v1456 = vmul.f32 %v1378, 0.01
        %v1457 = vmul.f32 %v1380, 0.01
        %v1458 = vmul.f32 %v1383, 0.01
        %v1459 = vmul.f32 %v1385, 0.01
        %v1460 = vmul.f32 %v1388, 0.01
        %v1461 = vmul.f32 %v1390, 0.01
        %v1462 = vmul.f32 %v1393, 0.01
        %v1463 = vmul.f32 %v1395, 0.01
        %v1464 = vmul.f32 %v1398, 0.01
        %v1465 = vmul.f32 %v1400, 0.01
        %v1466 = vsel %vm1402, %v1323, %v1434
        %v1467 = vsel %vm1403, %v1325, %v1435
        %v1468 = vsel %vm1404, %v1328, %v1436
        %v1469 = vsel %vm1405, %v1330, %v1437
        %v1470 = vsel %vm1406, %v1333, %v1438
        %v1471 = vsel %vm1407, %v1335, %v1439
        %v1472 = vsel %vm1408, %v1338, %v1440
        %v1473 = vsel %vm1409, %v1340, %v1441
        %v1474 = vsel %vm1410, %v1343, %v1442
        %v1475 = vsel %vm1411, %v1345, %v1443
        %v1476 = vsel %vm1412, %v1348, %v1444
        %v1477 = vsel %vm1413, %v1350, %v1445
        %v1478 = vsel %vm1414, %v1353, %v1446
        %v1479 = vsel %vm1415, %v1355, %v1447
        %v1480 = vsel %vm1416, %v1358, %v1448
        %v1481 = vsel %vm1417, %v1360, %v1449
        %v1482 = vsel %vm1418, %v1363, %v1450
        %v1483 = vsel %vm1419, %v1365, %v1451
        %v1484 = vsel %vm1420, %v1368, %v1452
        %v1485 = vsel %vm1421, %v1370, %v1453
        %v1486 = vsel %vm1422, %v1373, %v1454
        %v1487 = vsel %vm1423, %v1375, %v1455
        %v1488 = vsel %vm1424, %v1378, %v1456
        %v1489 = vsel %vm1425, %v1380, %v1457
        %v1490 = vsel %vm1426, %v1383, %v1458
        %v1491 = vsel %vm1427, %v1385, %v1459
        %v1492 = vsel %vm1428, %v1388, %v1460
        %v1493 = vsel %vm1429, %v1390, %v1461
        %v1494 = vsel %vm1430, %v1393, %v1462
        %v1495 = vsel %vm1431, %v1395, %v1463
        %v1496 = vsel %vm1432, %v1398, %v1464
        %v1497 = vsel %vm1433, %v1400, %v1465
        %v1498 = vpack.c.bf16 %v1467, %v1466
        %v1499 = vpack.c.bf16 %v1469, %v1468
        %v1500 = vpack.c.bf16 %v1471, %v1470
        %v1501 = vpack.c.bf16 %v1473, %v1472
        %v1502 = vpack.c.bf16 %v1475, %v1474
        %v1503 = vpack.c.bf16 %v1477, %v1476
        %v1504 = vpack.c.bf16 %v1479, %v1478
        %v1505 = vpack.c.bf16 %v1481, %v1480
        %v1506 = vpack.c.bf16 %v1483, %v1482
        %v1507 = vpack.c.bf16 %v1485, %v1484
        %v1508 = vpack.c.bf16 %v1487, %v1486
        %v1509 = vpack.c.bf16 %v1489, %v1488
        %v1510 = vpack.c.bf16 %v1491, %v1490
        %v1511 = vpack.c.bf16 %v1493, %v1492
        %v1512 = vpack.c.bf16 %v1495, %v1494
        %v1513 = vpack.c.bf16 %v1497, %v1496
        %v1514 = vld [vmem:[%s9] sm:$0xf]
        %v1515 = vld [vmem:[%s9 + $0x4] sm:$0xf]
        %v1516 = vld [vmem:[%s9 + $0x8] sm:$0xf]
        %v1517 = vld [vmem:[%s9 + $0xc] sm:$0xf]
        %v1518 = vld [vmem:[%s9 + $0x10] sm:$0xf]
        %v1519 = vld [vmem:[%s9 + $0x14] sm:$0xf]
        %v1520 = vld [vmem:[%s9 + $0x18] sm:$0xf]
        %v1521 = vld [vmem:[%s9 + $0x1c] sm:$0xf]
        %v1522 = vld [vmem:[%s9 + $0x20] sm:$0xf]
        %v1523 = vld [vmem:[%s9 + $0x24] sm:$0xf]
        %v1524 = vld [vmem:[%s9 + $0x28] sm:$0xf]
        %v1525 = vld [vmem:[%s9 + $0x2c] sm:$0xf]
        %v1526 = vld [vmem:[%s9 + $0x30] sm:$0xf]
        %v1527 = vld [vmem:[%s9 + $0x34] sm:$0xf]
        %v1528 = vld [vmem:[%s9 + $0x38] sm:$0xf]
        %v1529 = vld [vmem:[%s9 + $0x3c] sm:$0xf]
        %v1530 = vld [vmem:[%s10] sm:$0x1]
        %v1532 = vperm.slane %v1530, 0
        %v1550 = vunpack.c.l.b16 %v1514
        %v1551 = vunpack.c.l.b16 %v1515
        %v1552 = vunpack.c.l.b16 %v1516
        %v1553 = vunpack.c.l.b16 %v1517
        %v1554 = vunpack.c.l.b16 %v1518
        %v1555 = vunpack.c.l.b16 %v1519
        %v1556 = vunpack.c.l.b16 %v1520
        %v1557 = vunpack.c.l.b16 %v1521
        %v1558 = vunpack.c.l.b16 %v1522
        %v1559 = vunpack.c.l.b16 %v1523
        %v1560 = vunpack.c.l.b16 %v1524
        %v1561 = vunpack.c.l.b16 %v1525
        %v1562 = vunpack.c.l.b16 %v1526
        %v1563 = vunpack.c.l.b16 %v1527
        %v1564 = vunpack.c.l.b16 %v1528
        %v1565 = vunpack.c.l.b16 %v1529
        %v1566 = vpack.c.b16 %v1551, %v1550
        %v1567 = vpack.c.b16 %v1553, %v1552
        %v1568 = vpack.c.b16 %v1555, %v1554
        %v1569 = vpack.c.b16 %v1557, %v1556
        %v1570 = vpack.c.b16 %v1559, %v1558
        %v1571 = vpack.c.b16 %v1561, %v1560
        %v1572 = vpack.c.b16 %v1563, %v1562
        %v1573 = vpack.c.b16 %v1565, %v1564
        %1582 = vmatpush.bf16.msra.mxu0 %v1573
        %1583 = vmatpush.bf16.msra.mxu0 %v1572
        %1584 = vmatpush.bf16.msra.mxu0 %v1571
        %1585 = vmatpush.bf16.msra.mxu0 %v1570
        %1586 = vmatpush.bf16.msra.mxu0 %v1569
        %1587 = vmatpush.bf16.msra.mxu0 %v1568
        %1588 = vmatpush.bf16.msra.mxu0 %v1567
        %1589 = vmatpush.bf16.msra.mxu0 %v1566
        %1590 = vmatmul.bf16.gmra.mxu0 %v1498
        %v1591 = vpop.f32.mrf.mxu0
        %v1592 = vadd.f32 %v1532, %v1591
        %v1593 = vpop.f32.mrf.mxu0
        %v1594 = vadd.f32 %v1532, %v1593
        %1595 = vmatmul.bf16.gmra.mxu0 %v1499
        %v1596 = vpop.f32.mrf.mxu0
        %v1597 = vadd.f32 %v1532, %v1596
        %v1598 = vpop.f32.mrf.mxu0
        %v1599 = vadd.f32 %v1532, %v1598
        %1600 = vmatmul.bf16.gmra.mxu0 %v1500
        %v1601 = vpop.f32.mrf.mxu0
        %v1602 = vadd.f32 %v1532, %v1601
        %v1603 = vpop.f32.mrf.mxu0
        %v1604 = vadd.f32 %v1532, %v1603
        %1605 = vmatmul.bf16.gmra.mxu0 %v1501
        %v1606 = vpop.f32.mrf.mxu0
        %v1607 = vadd.f32 %v1532, %v1606
        %v1608 = vpop.f32.mrf.mxu0
        %v1609 = vadd.f32 %v1532, %v1608
        %1610 = vmatmul.bf16.gmra.mxu0 %v1502
        %v1611 = vpop.f32.mrf.mxu0
        %v1612 = vadd.f32 %v1532, %v1611
        %v1613 = vpop.f32.mrf.mxu0
        %v1614 = vadd.f32 %v1532, %v1613
        %1615 = vmatmul.bf16.gmra.mxu0 %v1503
        %v1616 = vpop.f32.mrf.mxu0
        %v1617 = vadd.f32 %v1532, %v1616
        %v1618 = vpop.f32.mrf.mxu0
        %v1619 = vadd.f32 %v1532, %v1618
        %1620 = vmatmul.bf16.gmra.mxu0 %v1504
        %v1621 = vpop.f32.mrf.mxu0
        %v1622 = vadd.f32 %v1532, %v1621
        %v1623 = vpop.f32.mrf.mxu0
        %v1624 = vadd.f32 %v1532, %v1623
        %1625 = vmatmul.bf16.gmra.mxu0 %v1505
        %v1626 = vpop.f32.mrf.mxu0
        %v1627 = vadd.f32 %v1532, %v1626
        %v1628 = vpop.f32.mrf.mxu0
        %v1629 = vadd.f32 %v1532, %v1628
        %1630 = vmatmul.bf16.gmra.mxu0 %v1506
        %v1631 = vpop.f32.mrf.mxu0
        %v1632 = vadd.f32 %v1532, %v1631
        %v1633 = vpop.f32.mrf.mxu0
        %v1634 = vadd.f32 %v1532, %v1633
        %1635 = vmatmul.bf16.gmra.mxu0 %v1507
        %v1636 = vpop.f32.mrf.mxu0
        %v1637 = vadd.f32 %v1532, %v1636
        %v1638 = vpop.f32.mrf.mxu0
        %v1639 = vadd.f32 %v1532, %v1638
        %1640 = vmatmul.bf16.gmra.mxu0 %v1508
        %v1641 = vpop.f32.mrf.mxu0
        %v1642 = vadd.f32 %v1532, %v1641
        %v1643 = vpop.f32.mrf.mxu0
        %v1644 = vadd.f32 %v1532, %v1643
        %1645 = vmatmul.bf16.gmra.mxu0 %v1509
        %v1646 = vpop.f32.mrf.mxu0
        %v1647 = vadd.f32 %v1532, %v1646
        %v1648 = vpop.f32.mrf.mxu0
        %v1649 = vadd.f32 %v1532, %v1648
        %1650 = vmatmul.bf16.gmra.mxu0 %v1510
        %v1651 = vpop.f32.mrf.mxu0
        %v1652 = vadd.f32 %v1532, %v1651
        %v1653 = vpop.f32.mrf.mxu0
        %v1654 = vadd.f32 %v1532, %v1653
        %1655 = vmatmul.bf16.gmra.mxu0 %v1511
        %v1656 = vpop.f32.mrf.mxu0
        %v1657 = vadd.f32 %v1532, %v1656
        %v1658 = vpop.f32.mrf.mxu0
        %v1659 = vadd.f32 %v1532, %v1658
        %1660 = vmatmul.bf16.gmra.mxu0 %v1512
        %v1661 = vpop.f32.mrf.mxu0
        %v1662 = vadd.f32 %v1532, %v1661
        %v1663 = vpop.f32.mrf.mxu0
        %v1664 = vadd.f32 %v1532, %v1663
        %1665 = vmatmul.bf16.gmra.mxu0 %v1513
        %v1666 = vpop.f32.mrf.mxu0
        %v1667 = vadd.f32 %v1532, %v1666
        %v1668 = vpop.f32.mrf.mxu0
        %v1669 = vadd.f32 %v1532, %v1668
        %1670 = vdwg.mxu0
        %v1671 = vtanh.pop %v1592
        %v1672 = vtanh.pop %v1594
        %v1673 = vtanh.pop %v1597
        %v1674 = vtanh.pop %v1599
        %v1675 = vtanh.pop %v1602
        %v1676 = vtanh.pop %v1604
        %v1677 = vtanh.pop %v1607
        %v1678 = vtanh.pop %v1609
        %v1679 = vtanh.pop %v1612
        %v1680 = vtanh.pop %v1614
        %v1681 = vtanh.pop %v1617
        %v1682 = vtanh.pop %v1619
        %v1683 = vtanh.pop %v1622
        %v1684 = vtanh.pop %v1624
        %v1685 = vtanh.pop %v1627
        %v1686 = vtanh.pop %v1629
        %v1687 = vtanh.pop %v1632
        %v1688 = vtanh.pop %v1634
        %v1689 = vtanh.pop %v1637
        %v1690 = vtanh.pop %v1639
        %v1691 = vtanh.pop %v1642
        %v1692 = vtanh.pop %v1644
        %v1693 = vtanh.pop %v1647
        %v1694 = vtanh.pop %v1649
        %v1695 = vtanh.pop %v1652
        %v1696 = vtanh.pop %v1654
        %v1697 = vtanh.pop %v1657
        %v1698 = vtanh.pop %v1659
        %v1699 = vtanh.pop %v1662
        %v1700 = vtanh.pop %v1664
        %v1701 = vtanh.pop %v1667
        %v1702 = vtanh.pop %v1669
        %1703 = vst [vmem:[%s380] sm:$0xff] %v1671
        %1704 = vst [vmem:[%s380 + $0x8] sm:$0xff] %v1672
        %1705 = vst [vmem:[%s380 + $0x10] sm:$0xff] %v1673
        %1706 = vst [vmem:[%s380 + $0x18] sm:$0xff] %v1674
        %1707 = vst [vmem:[%s380 + $0x20] sm:$0xff] %v1675
        %1708 = vst [vmem:[%s380 + $0x28] sm:$0xff] %v1676
        %1709 = vst [vmem:[%s380 + $0x30] sm:$0xff] %v1677
        %1710 = vst [vmem:[%s380 + $0x38] sm:$0xff] %v1678
        %1711 = vst [vmem:[%s380 + $0x40] sm:$0xff] %v1679
        %1712 = vst [vmem:[%s380 + $0x48] sm:$0xff] %v1680
        %1713 = vst [vmem:[%s380 + $0x50] sm:$0xff] %v1681
        %1714 = vst [vmem:[%s380 + $0x58] sm:$0xff] %v1682
        %1715 = vst [vmem:[%s380 + $0x60] sm:$0xff] %v1683
        %1716 = vst [vmem:[%s380 + $0x68] sm:$0xff] %v1684
        %1717 = vst [vmem:[%s380 + $0x70] sm:$0xff] %v1685
        %1718 = vst [vmem:[%s380 + $0x78] sm:$0xff] %v1686
        %1719 = vst [vmem:[%s380 + $0x80] sm:$0xff] %v1687
        %1720 = vst [vmem:[%s380 + $0x88] sm:$0xff] %v1688
        %1721 = vst [vmem:[%s380 + $0x90] sm:$0xff] %v1689
        %1722 = vst [vmem:[%s380 + $0x98] sm:$0xff] %v1690
        %1723 = vst [vmem:[%s380 + $0xa0] sm:$0xff] %v1691
        %1724 = vst [vmem:[%s380 + $0xa8] sm:$0xff] %v1692
        %1725 = vst [vmem:[%s380 + $0xb0] sm:$0xff] %v1693
        %1726 = vst [vmem:[%s380 + $0xb8] sm:$0xff] %v1694
        %1727 = vst [vmem:[%s380 + $0xc0] sm:$0xff] %v1695
        %1728 = vst [vmem:[%s380 + $0xc8] sm:$0xff] %v1696
        %1729 = vst [vmem:[%s380 + $0xd0] sm:$0xff] %v1697
        %1730 = vst [vmem:[%s380 + $0xd8] sm:$0xff] %v1698
        %1731 = vst [vmem:[%s380 + $0xe0] sm:$0xff] %v1699
        %1732 = vst [vmem:[%s380 + $0xe8] sm:$0xff] %v1700
        %1733 = vst [vmem:[%s380 + $0xf0] sm:$0xff] %v1701
        %1734 = vst [vmem:[%s380 + $0xf8] sm:$0xff] %v1702
        %s1735 = sand.u32 %s269, 1
        %s1736 = scalar_lea.sflag [#allocation3], %s1735
        %s1737 = sand.u32 %s269, 1
        %s1738 = smul.addr %s1737, 256
        %s1739 = scalar_lea.vmem [#allocation2], %s1738
        // Predicated region
        $region65: #{tpu_custom_call.1} parent=63 // pred_check
          %p1740 = pneg %p279
        $region66: #{tpu_custom_call.1} parent=63 // pred_check_branch
          %1742 = sbr.rel (%p1740) target = $region68
        $region67: #{tpu_custom_call.1} parent=63 // pred_region
          %s1743 = smul.u32 32, %s25
          %1745 = vsyncadd %s1736, 0
          %s1746 = smul.addr %s1743, 8
          %s1747 = scalar_lea.hbm %s11, %s1746
          %s1748 = sshll.u32 %s1739, 4
          %s1749 = int_to_ptr.vmem [resolvable:$true] %s1748
          %s1750 = sshll.u32 %s1747, 4
          %s1751 = int_to_ptr.hbm [resolvable:$true] %s1750
          %1756 = dma.vmem_to_hbm [thread:$0]  %s1749, 4096, %s1751, %s1736, 128, 128, 8
        $region68: #{tpu_custom_call.1} parent=63 // pred_fallthru
          _
      $region64: #{tpu_custom_call.1} parent=5 // pred_fallthru
        _
      %p1757 = scmp.le.s32.totalorder 2, %s20
      // Predicated region
      $region69: #{tpu_custom_call.1} parent=5 // pred_check
        %p1758 = pneg %p1757
      $region70: #{tpu_custom_call.1} parent=5 // pred_check_branch
        %1760 = sbr.rel (%p1758) target = $region72
      $region71: #{tpu_custom_call.1} parent=5 // pred_region
        %s1761 = ssub.s32 %s20, 2
        // Predicated region
        $region73: #{tpu_custom_call.1} parent=71 // pred_check
          %p1762 = pneg %p285
        $region74: #{tpu_custom_call.1} parent=71 // pred_check_branch
          %1764 = sbr.rel (%p1762) target = $region76
        $region75: #{tpu_custom_call.1} parent=71 // pred_region
          %s1765 = sand.u32 %s270, 1
          %s1766 = scalar_lea.sflag [#allocation3], %s1765
          %s1767 = sand.u32 %s270, 1
          %s1768 = smul.addr %s1767, 256
          %s1769 = scalar_lea.vmem [#allocation2], %s1768
          %1771 = dma.done %s1766, 4096
        $region76: #{tpu_custom_call.1} parent=71 // pred_fallthru
          _
      $region72: #{tpu_custom_call.1} parent=5 // pred_fallthru
        _
    $region6: #{tpu_custom_call.1} parent=1 // loop_footer
      %s24 = sadd.s32 1, %s20
    $region7: #{tpu_custom_call.1} parent=1 // loop_footer_branch
      %19 = sbr.rel target = $region3
    $region8: #{tpu_custom_call.1} parent=1 // loop_exit
      _
    %1772 = vsyncpa [#allocation3], 1
    %s1773 = scalar_lea.sflag [#allocation3], 1
    %1774 = vsyncpa %s1773, 1

</llo_original>
